<compile_context>
chip_gen: v7x
topology: tpu7x:2x2x1
jax: 0.10.0
libtpu: 0.0.40
codegen_flags: <defaults>
</compile_context>

<pallas_src>
import functools

import jax
import jax.numpy as jnp
from jax import lax
from jax.experimental import pallas as pl
from jax.experimental.pallas import tpu as pltpu

EPS = 1e-5  # PyTorch BatchNorm2d default


# ---------------------------------------------------------------------------
# Kernel
# ---------------------------------------------------------------------------
def resblock_kernel(x_ref, m1_ref, m2_ref, g1_ref, be1_ref, g2_ref, be2_ref,
                    o_ref, pad_ref, *, inv_nhw, num_channels):
    """Fused ResBlock forward on the folded, row-major (HG, N, L) layout.

    x_ref   : (HG, N, L)      input, L = G*W*C lanes (lane-dense, L % 128 == 0)
    m*_ref  : (3L, L)  bf16   block-banded conv weights, taps stacked along K
    g*/be*  : (1, L)   f32    BN gamma / beta, tiled across lanes
    o_ref   : (HG, N, L)      output
    pad_ref : (HG+2, N, L)    scratch: data in rows 1..HG, zero halo rows 0, HG+1
    """
    HG, N, L = x_ref.shape
    R = HG * N

    # Channel-pooling matrix built in-kernel (never shipped over HBM):
    # P[a, b] = 1 iff lanes a and b hold the same channel (a % C == b % C).
    li = lax.broadcasted_iota(jnp.int32, (L, L), 0)
    lj = lax.broadcasted_iota(jnp.int32, (L, L), 1)
    pool = (li % num_channels == lj % num_channels).astype(jnp.float32)

    # Zero only the halo super-rows; the interior is always fully overwritten.
    zero_row = jnp.zeros((1, N, L), jnp.float32)
    pad_ref[0:1, :, :] = zero_row
    pad_ref[HG + 1:HG + 2, :, :] = zero_row

    def conv3x3(m_ref):
        # 3x3 "same" conv == ONE (R, 3L) x (3L, L) MXU matmul: the three
        # row-shifted (contiguous -> free reshape) views are concatenated along
        # K so the MXU accumulates the taps internally (single matmul per conv,
        # bf16 operands, f32 accumulation).
        lhs = jnp.concatenate(
            [pad_ref[t:t + HG, :, :].reshape(R, L).astype(jnp.bfloat16)
             for t in range(3)], axis=-1)
        return jnp.dot(lhs, m_ref[...], preferred_element_type=jnp.float32)

    def batchnorm(y, g_ref, be_ref):
        # Training-mode BN (biased variance). Row-sum (sublane reduce) FIRST,
        # then pool lanes of the same channel with one tiny (2, L) x (L, L)
        # matmul, which also broadcasts the stats back to every lane.
        # NOTE: single-pass E[y^2]-E[y]^2 in f32; fine here since conv outputs
        # are near zero-mean.  TODO(synk): Welford/two-pass for general inputs.
        stats = jnp.concatenate(
            [jnp.sum(y, axis=0, keepdims=True),
             jnp.sum(y * y, axis=0, keepdims=True)], axis=0)         # (2, L)
        pooled = jnp.dot(stats, pool, preferred_element_type=jnp.float32)
        mean = pooled[0:1, :] * inv_nhw
        var = pooled[1:2, :] * inv_nhw - mean * mean   # biased var (training)
        inv = lax.rsqrt(var + EPS)
        return (y - mean) * inv * g_ref[...] + be_ref[...]

    x = x_ref[...]

    # conv1 -> BN1 -> ReLU.  Conv bias omitted: it adds a per-channel constant
    # that training-mode BN's batch-mean subtraction cancels exactly (NOT valid
    # for eval-mode running statistics).
    pad_ref[1:HG + 1, :, :] = x
    h = jnp.maximum(batchnorm(conv3x3(m1_ref), g1_ref, be1_ref), 0.0)

    # conv2 -> BN2 (reuse the halo scratch; halo rows are still zero).
    pad_ref[1:HG + 1, :, :] = h.reshape(HG, N, L)
    h2 = batchnorm(conv3x3(m2_ref), g2_ref, be2_ref)

    # residual add + ReLU, lane-dense (L % 128 == 0) unmasked stores.
    o_ref[...] = jnp.maximum(h2.reshape(HG, N, L) + x, 0.0)


# ---------------------------------------------------------------------------
# Wrapper: layout folding + weight transforms + pallas_call
# ---------------------------------------------------------------------------
def _choose_group(H, W, C):
    # Fold G rows of H into the lane axis until the lane width reaches 128.
    # (Do NOT grow L past 128: tap fusion already widens the MXU contraction
    # to K=3L without adding HBM bytes.)
    G = 1
    while G < H and H % (2 * G) == 0 and G * W * C < 128:
        G *= 2
    return G


def _build_band_matrix(w_hwio, G, W):
    """(3,3,Cin,Cout) HWIO weights -> (3L, L) bf16 block-banded matrix, L=G*W*C.

    Tap t (super-row shift -1/0/+1) occupies rows [t*L, (t+1)*L):
      M[t*L + (g_i*W+w_i)*C+ci, (g_o*W+w_o)*C+co] = w[kh, kw, ci, co]
    with kh = g_i - g_o + (t-1)*G + 1 and kw = w_i - w_o + 1 when both lie in
    [0, 2], else 0.  "Same" W-padding is encoded by the validity mask;
    H-padding is handled by the zero halo rows in the kernel scratch.
    """
    C = w_hwio.shape[2]
    L = G * W * C
    g_i = jnp.arange(G).reshape(G, 1, 1, 1)
    w_i = jnp.arange(W).reshape(1, W, 1, 1)
    g_o = jnp.arange(G).reshape(1, 1, G, 1)
    w_o = jnp.arange(W).reshape(1, 1, 1, W)
    mats = []
    for t_shift in (-1, 0, 1):
        kh = g_i - g_o + t_shift * G + 1
        kw = w_i - w_o + 1
        valid = (kh >= 0) & (kh <= 2) & (kw >= 0) & (kw <= 2)      # (G, W, G, W)
        blk = w_hwio[jnp.clip(kh, 0, 2), jnp.clip(kw, 0, 2)]       # (G,W,G,W,C,C)
        blk = jnp.where(valid[..., None, None], blk, 0.0)
        # (g_i, w_i, ci, g_o, w_o, co) -> (L, L)
        mats.append(blk.transpose(0, 1, 4, 2, 3, 5).reshape(L, L))
    # Stack taps along K and ship in bf16: the band matrices dominate HBM
    # traffic; conv matmuls accumulate in f32 via preferred_element_type.
    return jnp.concatenate(mats, axis=0).astype(jnp.bfloat16)      # (3L, L)


def resblock_pallas(x_nhwc, params):
    (w1, b1, g1, be1, w2, b2, g2, be2) = params
    del b1, b2  # conv biases cancel exactly under training-mode BN
    N, H, W, C = x_nhwc.shape
    G = _choose_group(H, W, C)
    HG = H // G
    L = G * W * C
    R = N * HG
    if L % 128 != 0:
        # Lane-dense guarantee (unmasked 128-lane stores, bounded band size).
        # TODO(synk): pad the lane axis up to a multiple of 128 for odd shapes.
        raise ValueError(f"G*W*C = {L} is not a multiple of 128")

    # Layout plumbing (wrapper-side reshape/transpose + one-time weight
    # transforms).  Row-major (HG, N, L) keeps the kernel's tap slices
    # contiguous so their reshape to (R, L) is free.
    x_fold = jnp.transpose(x_nhwc.reshape(N, HG, L), (1, 0, 2))
    m1 = _build_band_matrix(w1, G, W)
    m2 = _build_band_matrix(w2, G, W)
    reps = (1, L // C)
    g1r, be1r = jnp.tile(g1, reps), jnp.tile(be1, reps)
    g2r, be2r = jnp.tile(g2, reps), jnp.tile(be2, reps)

    kernel = functools.partial(resblock_kernel, inv_nhw=1.0 / (N * H * W),
                               num_channels=C)
    vmem = pl.BlockSpec(memory_space=pltpu.MemorySpace.VMEM)

    # 2 convs as (R, 3L) x (3L, L) + 2 BN stat poolings as (2, L) x (L, L).
    flops = 2 * (2 * R * (3 * L) * L) + 2 * (2 * 2 * L * L)
    bytes_accessed = (4 * x_fold.size            # input (f32)
                      + 4 * x_fold.size          # output (f32)
                      + 2 * (m1.size + m2.size)  # band matrices (bf16)
                      + 4 * 4 * L)               # gamma / beta

    # TODO(synk): for large N*H*W, add a leading "parallel" grid axis over row
    # tiles (v7x has two TensorCores) with a two-pass BN-statistics reduction,
    # and budget the per-TC tile (pad + x + h + out + double-buffered weights)
    # against v7x's 64 MiB VMEM; at this toy size everything (<0.5 MiB) fits in
    # a single fused invocation on v5e/v6e/v7x.
    out_fold = pl.pallas_call(
        kernel,
        out_shape=jax.ShapeDtypeStruct((HG, N, L), jnp.float32),
        in_specs=[vmem] * 7,
        out_specs=vmem,
        scratch_shapes=[pltpu.VMEM((HG + 2, N, L), jnp.float32)],
        compiler_params=pltpu.CompilerParams(vmem_limit_bytes=32 * 1024 * 1024),
        cost_estimate=pl.CostEstimate(flops=flops, transcendentals=2 * L,
                                      bytes_accessed=bytes_accessed),
    )(x_fold, m1, m2, g1r, be1r, g2r, be2r)
    return jnp.transpose(out_fold, (1, 0, 2)).reshape(N, H, W, C)


# ---------------------------------------------------------------------------
# Pure-JAX reference (PyTorch training-mode semantics) for correctness check
# ---------------------------------------------------------------------------
def resblock_reference(x_nhwc, params):
    (w1, b1, g1, be1, w2, b2, g2, be2) = params

    def conv(x, w, b):
        y = lax.conv_general_dilated(
            x, w, window_strides=(1, 1), padding="SAME",
            dimension_numbers=("NHWC", "HWIO", "NHWC"))
        return y + b.reshape(1, 1, 1, -1)

    def bn(y, g, be):
        mean = jnp.mean(y, axis=(0, 1, 2), keepdims=True)
        var = jnp.mean((y - mean) ** 2, axis=(0, 1, 2), keepdims=True)
        return (y - mean) / jnp.sqrt(var + EPS) * g.reshape(1, 1, 1, -1) \
            + be.reshape(1, 1, 1, -1)

    h = jnp.maximum(bn(conv(x_nhwc, w1, b1), g1, be1), 0.0)
    h2 = bn(conv(h, w2, b2), g2, be2)
    return jnp.maximum(h2 + x_nhwc, 0.0)


def make_params(key, C):
    ks = jax.random.split(key, 8)
    w1 = 0.1 * jax.random.normal(ks[0], (3, 3, C, C), jnp.float32)
    b1 = 0.1 * jax.random.normal(ks[1], (1, C), jnp.float32)
    g1 = 1.0 + 0.1 * jax.random.normal(ks[2], (1, C), jnp.float32)
    be1 = 0.1 * jax.random.normal(ks[3], (1, C), jnp.float32)
    w2 = 0.1 * jax.random.normal(ks[4], (3, 3, C, C), jnp.float32)
    b2 = 0.1 * jax.random.normal(ks[5], (1, C), jnp.float32)
    g2 = 1.0 + 0.1 * jax.random.normal(ks[6], (1, C), jnp.float32)
    be2 = 0.1 * jax.random.normal(ks[7], (1, C), jnp.float32)
    return (w1, b1, g1, be1, w2, b2, g2, be2)


if __name__ == "__main__":
    key = jax.random.PRNGKey(0)
    k_x, k_p = jax.random.split(key)

    N, C, H, W = 2, 4, 16, 16
    x_nchw = jax.random.normal(k_x, (N, C, H, W), jnp.float32)  # PyTorch layout
    x_nhwc = jnp.transpose(x_nchw, (0, 2, 3, 1))                # kernel layout

    params = make_params(k_p, C)

    out = jax.jit(resblock_pallas)(x_nhwc, params)
    out = jax.block_until_ready(out)

    ref = resblock_reference(x_nhwc, params)
    assert out.shape == (N, H, W, C)
    # Tolerance covers bf16 MXU operands (conv weights & shifted activations)
    # in the kernel vs the f32 XLA conv reference, plus single-pass-variance
    # and summation-order differences; any structural bug would be O(1).
    err = float(jnp.max(jnp.abs(out - ref)))
    assert jnp.allclose(out, ref, atol=1e-2, rtol=1e-2), err

    print("KERNEL_OK")
</pallas_src>

<mosaic_0001>
module attributes {stable_mosaic.version = 11 : i64} {
  func.func @resblock_kernel(%arg0: memref<8x2x128xf32, #tpu.memory_space<vmem>>, %arg1: memref<384x128xbf16, #tpu.memory_space<vmem>>, %arg2: memref<384x128xbf16, #tpu.memory_space<vmem>>, %arg3: memref<1x128xf32, #tpu.memory_space<vmem>>, %arg4: memref<1x128xf32, #tpu.memory_space<vmem>>, %arg5: memref<1x128xf32, #tpu.memory_space<vmem>>, %arg6: memref<1x128xf32, #tpu.memory_space<vmem>>, %arg7: memref<8x2x128xf32, #tpu.memory_space<vmem>>, %arg8: memref<10x2x128xf32, #tpu.memory_space<vmem>>) attributes {dimension_semantics = [], scalar_prefetch = 0 : i64, scratch_operands = 1 : i64, tpu.core_type = #tpu.core_type<tc>} {
    %0 = tpu.iota {dimensions = array<i32: 0>} : vector<128x128xi32>
    %1 = tpu.iota {dimensions = array<i32: 1>} : vector<128x128xi32>
    %c4_i32 = arith.constant 4 : i32
    %c0_i32 = arith.constant 0 : i32
    %2 = arith.cmpi eq, %c4_i32, %c0_i32 : i32
    %c1_i32 = arith.constant 1 : i32
    %3 = arith.select %2, %c1_i32, %c4_i32 : i32
    %4 = vector.broadcast %3 : i32 to vector<128x128xi32>
    %5 = arith.remsi %0, %4 : vector<128x128xi32>
    %c0_i32_0 = arith.constant 0 : i32
    %6 = vector.broadcast %c0_i32_0 : i32 to vector<128x128xi32>
    %7 = arith.cmpi ne, %5, %6 : vector<128x128xi32>
    %c0_i32_1 = arith.constant 0 : i32
    %8 = vector.broadcast %c0_i32_1 : i32 to vector<128x128xi32>
    %9 = arith.cmpi slt, %5, %8 : vector<128x128xi32>
    %c0_i32_2 = arith.constant 0 : i32
    %10 = arith.cmpi slt, %3, %c0_i32_2 : i32
    %11 = vector.broadcast %10 : i1 to vector<128x128xi1>
    %12 = vector.broadcast %11 : vector<128x128xi1> to vector<128x128xi1>
    %13 = arith.xori %9, %12 : vector<128x128xi1>
    %14 = arith.andi %13, %7 : vector<128x128xi1>
    %15 = vector.broadcast %3 : i32 to vector<128x128xi32>
    %16 = arith.addi %5, %15 : vector<128x128xi32>
    %17 = arith.select %14, %16, %5 : vector<128x128xi1>, vector<128x128xi32>
    %c4_i32_3 = arith.constant 4 : i32
    %c0_i32_4 = arith.constant 0 : i32
    %18 = arith.cmpi eq, %c4_i32_3, %c0_i32_4 : i32
    %c1_i32_5 = arith.constant 1 : i32
    %19 = arith.select %18, %c1_i32_5, %c4_i32_3 : i32
    %20 = vector.broadcast %19 : i32 to vector<128x128xi32>
    %21 = arith.remsi %1, %20 : vector<128x128xi32>
    %c0_i32_6 = arith.constant 0 : i32
    %22 = vector.broadcast %c0_i32_6 : i32 to vector<128x128xi32>
    %23 = arith.cmpi ne, %21, %22 : vector<128x128xi32>
    %c0_i32_7 = arith.constant 0 : i32
    %24 = vector.broadcast %c0_i32_7 : i32 to vector<128x128xi32>
    %25 = arith.cmpi slt, %21, %24 : vector<128x128xi32>
    %c0_i32_8 = arith.constant 0 : i32
    %26 = arith.cmpi slt, %19, %c0_i32_8 : i32
    %27 = vector.broadcast %26 : i1 to vector<128x128xi1>
    %28 = vector.broadcast %27 : vector<128x128xi1> to vector<128x128xi1>
    %29 = arith.xori %25, %28 : vector<128x128xi1>
    %30 = arith.andi %29, %23 : vector<128x128xi1>
    %31 = vector.broadcast %19 : i32 to vector<128x128xi32>
    %32 = arith.addi %21, %31 : vector<128x128xi32>
    %33 = arith.select %30, %32, %21 : vector<128x128xi1>, vector<128x128xi32>
    %34 = arith.cmpi eq, %17, %33 : vector<128x128xi32>
    %35 = arith.extui %34 : vector<128x128xi1> to vector<128x128xi32>
    %36 = arith.sitofp %35 : vector<128x128xi32> to vector<128x128xf32>
    %cst = arith.constant 0.000000e+00 : f32
    %37 = vector.broadcast %cst : f32 to vector<1x2x128xf32>
    %c0 = arith.constant 0 : index
    %c0_9 = arith.constant 0 : index
    %c0_10 = arith.constant 0 : index
    %38 = vector.load %arg8[%c0, %c0_9, %c0_10] : memref<10x2x128xf32, #tpu.memory_space<vmem>>, vector<1x2x128xf32>
    tpu.vector_store %arg8[%c0, %c0_9, %c0_10], %37 {strides = array<i32>} : memref<10x2x128xf32, #tpu.memory_space<vmem>>, vector<1x2x128xf32>,
    %c9 = arith.constant 9 : index
    %c0_11 = arith.constant 0 : index
    %c0_12 = arith.constant 0 : index
    %39 = vector.load %arg8[%c9, %c0_11, %c0_12] : memref<10x2x128xf32, #tpu.memory_space<vmem>>, vector<1x2x128xf32>
    tpu.vector_store %arg8[%c9, %c0_11, %c0_12], %37 {strides = array<i32>} : memref<10x2x128xf32, #tpu.memory_space<vmem>>, vector<1x2x128xf32>,
    %c0_13 = arith.constant 0 : index
    %c0_14 = arith.constant 0 : index
    %c0_15 = arith.constant 0 : index
    %40 = vector.load %arg0[%c0_13, %c0_14, %c0_15] : memref<8x2x128xf32, #tpu.memory_space<vmem>>, vector<8x2x128xf32>
    %c1 = arith.constant 1 : index
    %c0_16 = arith.constant 0 : index
    %c0_17 = arith.constant 0 : index
    %41 = vector.load %arg8[%c1, %c0_16, %c0_17] : memref<10x2x128xf32, #tpu.memory_space<vmem>>, vector<8x2x128xf32>
    tpu.vector_store %arg8[%c1, %c0_16, %c0_17], %40 {strides = array<i32>} : memref<10x2x128xf32, #tpu.memory_space<vmem>>, vector<8x2x128xf32>,
    %c0_18 = arith.constant 0 : index
    %c0_19 = arith.constant 0 : index
    %c0_20 = arith.constant 0 : index
    %42 = vector.load %arg8[%c0_18, %c0_19, %c0_20] : memref<10x2x128xf32, #tpu.memory_space<vmem>>, vector<8x2x128xf32>
    %43 = vector.shape_cast %42 : vector<8x2x128xf32> to vector<16x128xf32>
    %44 = arith.truncf %43 : vector<16x128xf32> to vector<16x128xbf16>
    %c1_21 = arith.constant 1 : index
    %c0_22 = arith.constant 0 : index
    %c0_23 = arith.constant 0 : index
    %45 = vector.load %arg8[%c1_21, %c0_22, %c0_23] : memref<10x2x128xf32, #tpu.memory_space<vmem>>, vector<8x2x128xf32>
    %46 = vector.shape_cast %45 : vector<8x2x128xf32> to vector<16x128xf32>
    %47 = arith.truncf %46 : vector<16x128xf32> to vector<16x128xbf16>
    %c2 = arith.constant 2 : index
    %c0_24 = arith.constant 0 : index
    %c0_25 = arith.constant 0 : index
    %48 = vector.load %arg8[%c2, %c0_24, %c0_25] : memref<10x2x128xf32, #tpu.memory_space<vmem>>, vector<8x2x128xf32>
    %49 = vector.shape_cast %48 : vector<8x2x128xf32> to vector<16x128xf32>
    %50 = arith.truncf %49 : vector<16x128xf32> to vector<16x128xbf16>
    %51 = tpu.concatenate %44, %47, %50 in 1 : vector<16x128xbf16>, vector<16x128xbf16>, vector<16x128xbf16> -> vector<16x384xbf16>
    %c0_26 = arith.constant 0 : index
    %c0_27 = arith.constant 0 : index
    %52 = vector.load %arg1[%c0_26, %c0_27] : memref<384x128xbf16, #tpu.memory_space<vmem>>, vector<384x128xbf16>
    %cst_28 = arith.constant dense<0.000000e+00> : vector<16x128xf32>
    %53 = tpu.matmul %51, %52, %cst_28 {dimension_numbers = #tpu.dot_dimension_numbers<[1], [0], [0], [1], [0, 0, 1, 1], [], []>} : vector<16x384xbf16>, vector<384x128xbf16>, vector<16x128xf32> -> vector<16x128xf32>
    %cst_29 = arith.constant dense<0.000000e+00> : vector<128xf32>
    %54 = vector.multi_reduction <add>, %53, %cst_29 [0] : vector<16x128xf32> to vector<128xf32>
    %55 = vector.shape_cast %54 : vector<128xf32> to vector<1x128xf32>
    %56 = arith.mulf %53, %53 : vector<16x128xf32>
    %cst_30 = arith.constant dense<0.000000e+00> : vector<128xf32>
    %57 = vector.multi_reduction <add>, %56, %cst_30 [0] : vector<16x128xf32> to vector<128xf32>
    %58 = vector.shape_cast %57 : vector<128xf32> to vector<1x128xf32>
    %59 = tpu.concatenate %55, %58 in 0 : vector<1x128xf32>, vector<1x128xf32> -> vector<2x128xf32>
    %cst_31 = arith.constant dense<0.000000e+00> : vector<2x128xf32>
    %60 = tpu.matmul %59, %36, %cst_31 {dimension_numbers = #tpu.dot_dimension_numbers<[1], [0], [0], [1], [0, 0, 1, 1], [], []>} : vector<2x128xf32>, vector<128x128xf32>, vector<2x128xf32> -> vector<2x128xf32>
    %61 = vector.extract_strided_slice %60 {offsets = [0, 0], sizes = [1, 128], strides = [1, 1]} : vector<2x128xf32> to vector<1x128xf32>
    %cst_32 = arith.constant 0.001953125 : f32
    %62 = vector.broadcast %cst_32 : f32 to vector<1x128xf32>
    %63 = arith.mulf %61, %62 : vector<1x128xf32>
    %64 = vector.extract_strided_slice %60 {offsets = [1, 0], sizes = [1, 128], strides = [1, 1]} : vector<2x128xf32> to vector<1x128xf32>
    %cst_33 = arith.constant 0.001953125 : f32
    %65 = vector.broadcast %cst_33 : f32 to vector<1x128xf32>
    %66 = arith.mulf %64, %65 : vector<1x128xf32>
    %67 = arith.mulf %63, %63 : vector<1x128xf32>
    %68 = arith.subf %66, %67 : vector<1x128xf32>
    %cst_34 = arith.constant 9.99999974E-6 : f32
    %69 = vector.broadcast %cst_34 : f32 to vector<1x128xf32>
    %70 = arith.addf %68, %69 : vector<1x128xf32>
    %71 = math.rsqrt %70 : vector<1x128xf32>
    %72 = vector.broadcast %63 : vector<1x128xf32> to vector<16x128xf32>
    %73 = arith.subf %53, %72 : vector<16x128xf32>
    %74 = vector.broadcast %71 : vector<1x128xf32> to vector<16x128xf32>
    %75 = arith.mulf %73, %74 : vector<16x128xf32>
    %c0_35 = arith.constant 0 : index
    %c0_36 = arith.constant 0 : index
    %76 = vector.load %arg3[%c0_35, %c0_36] : memref<1x128xf32, #tpu.memory_space<vmem>>, vector<1x128xf32>
    %77 = vector.broadcast %76 : vector<1x128xf32> to vector<16x128xf32>
    %78 = arith.mulf %75, %77 : vector<16x128xf32>
    %c0_37 = arith.constant 0 : index
    %c0_38 = arith.constant 0 : index
    %79 = vector.load %arg4[%c0_37, %c0_38] : memref<1x128xf32, #tpu.memory_space<vmem>>, vector<1x128xf32>
    %80 = vector.broadcast %79 : vector<1x128xf32> to vector<16x128xf32>
    %81 = arith.addf %78, %80 : vector<16x128xf32>
    %cst_39 = arith.constant 0.000000e+00 : f32
    %82 = vector.broadcast %cst_39 : f32 to vector<16x128xf32>
    %83 = arith.maximumf %81, %82 : vector<16x128xf32>
    %84 = vector.shape_cast %83 : vector<16x128xf32> to vector<8x2x128xf32>
    %c1_40 = arith.constant 1 : index
    %c0_41 = arith.constant 0 : index
    %c0_42 = arith.constant 0 : index
    %85 = vector.load %arg8[%c1_40, %c0_41, %c0_42] : memref<10x2x128xf32, #tpu.memory_space<vmem>>, vector<8x2x128xf32>
    tpu.vector_store %arg8[%c1_40, %c0_41, %c0_42], %84 {strides = array<i32>} : memref<10x2x128xf32, #tpu.memory_space<vmem>>, vector<8x2x128xf32>,
    %c0_43 = arith.constant 0 : index
    %c0_44 = arith.constant 0 : index
    %c0_45 = arith.constant 0 : index
    %86 = vector.load %arg8[%c0_43, %c0_44, %c0_45] : memref<10x2x128xf32, #tpu.memory_space<vmem>>, vector<8x2x128xf32>
    %87 = vector.shape_cast %86 : vector<8x2x128xf32> to vector<16x128xf32>
    %88 = arith.truncf %87 : vector<16x128xf32> to vector<16x128xbf16>
    %c1_46 = arith.constant 1 : index
    %c0_47 = arith.constant 0 : index
    %c0_48 = arith.constant 0 : index
    %89 = vector.load %arg8[%c1_46, %c0_47, %c0_48] : memref<10x2x128xf32, #tpu.memory_space<vmem>>, vector<8x2x128xf32>
    %90 = vector.shape_cast %89 : vector<8x2x128xf32> to vector<16x128xf32>
    %91 = arith.truncf %90 : vector<16x128xf32> to vector<16x128xbf16>
    %c2_49 = arith.constant 2 : index
    %c0_50 = arith.constant 0 : index
    %c0_51 = arith.constant 0 : index
    %92 = vector.load %arg8[%c2_49, %c0_50, %c0_51] : memref<10x2x128xf32, #tpu.memory_space<vmem>>, vector<8x2x128xf32>
    %93 = vector.shape_cast %92 : vector<8x2x128xf32> to vector<16x128xf32>
    %94 = arith.truncf %93 : vector<16x128xf32> to vector<16x128xbf16>
    %95 = tpu.concatenate %88, %91, %94 in 1 : vector<16x128xbf16>, vector<16x128xbf16>, vector<16x128xbf16> -> vector<16x384xbf16>
    %c0_52 = arith.constant 0 : index
    %c0_53 = arith.constant 0 : index
    %96 = vector.load %arg2[%c0_52, %c0_53] : memref<384x128xbf16, #tpu.memory_space<vmem>>, vector<384x128xbf16>
    %cst_54 = arith.constant dense<0.000000e+00> : vector<16x128xf32>
    %97 = tpu.matmul %95, %96, %cst_54 {dimension_numbers = #tpu.dot_dimension_numbers<[1], [0], [0], [1], [0, 0, 1, 1], [], []>} : vector<16x384xbf16>, vector<384x128xbf16>, vector<16x128xf32> -> vector<16x128xf32>
    %cst_55 = arith.constant dense<0.000000e+00> : vector<128xf32>
    %98 = vector.multi_reduction <add>, %97, %cst_55 [0] : vector<16x128xf32> to vector<128xf32>
    %99 = vector.shape_cast %98 : vector<128xf32> to vector<1x128xf32>
    %100 = arith.mulf %97, %97 : vector<16x128xf32>
    %cst_56 = arith.constant dense<0.000000e+00> : vector<128xf32>
    %101 = vector.multi_reduction <add>, %100, %cst_56 [0] : vector<16x128xf32> to vector<128xf32>
    %102 = vector.shape_cast %101 : vector<128xf32> to vector<1x128xf32>
    %103 = tpu.concatenate %99, %102 in 0 : vector<1x128xf32>, vector<1x128xf32> -> vector<2x128xf32>
    %cst_57 = arith.constant dense<0.000000e+00> : vector<2x128xf32>
    %104 = tpu.matmul %103, %36, %cst_57 {dimension_numbers = #tpu.dot_dimension_numbers<[1], [0], [0], [1], [0, 0, 1, 1], [], []>} : vector<2x128xf32>, vector<128x128xf32>, vector<2x128xf32> -> vector<2x128xf32>
    %105 = vector.extract_strided_slice %104 {offsets = [0, 0], sizes = [1, 128], strides = [1, 1]} : vector<2x128xf32> to vector<1x128xf32>
    %cst_58 = arith.constant 0.001953125 : f32
    %106 = vector.broadcast %cst_58 : f32 to vector<1x128xf32>
    %107 = arith.mulf %105, %106 : vector<1x128xf32>
    %108 = vector.extract_strided_slice %104 {offsets = [1, 0], sizes = [1, 128], strides = [1, 1]} : vector<2x128xf32> to vector<1x128xf32>
    %cst_59 = arith.constant 0.001953125 : f32
    %109 = vector.broadcast %cst_59 : f32 to vector<1x128xf32>
    %110 = arith.mulf %108, %109 : vector<1x128xf32>
    %111 = arith.mulf %107, %107 : vector<1x128xf32>
    %112 = arith.subf %110, %111 : vector<1x128xf32>
    %cst_60 = arith.constant 9.99999974E-6 : f32
    %113 = vector.broadcast %cst_60 : f32 to vector<1x128xf32>
    %114 = arith.addf %112, %113 : vector<1x128xf32>
    %115 = math.rsqrt %114 : vector<1x128xf32>
    %116 = vector.broadcast %107 : vector<1x128xf32> to vector<16x128xf32>
    %117 = arith.subf %97, %116 : vector<16x128xf32>
    %118 = vector.broadcast %115 : vector<1x128xf32> to vector<16x128xf32>
    %119 = arith.mulf %117, %118 : vector<16x128xf32>
    %c0_61 = arith.constant 0 : index
    %c0_62 = arith.constant 0 : index
    %120 = vector.load %arg5[%c0_61, %c0_62] : memref<1x128xf32, #tpu.memory_space<vmem>>, vector<1x128xf32>
    %121 = vector.broadcast %120 : vector<1x128xf32> to vector<16x128xf32>
    %122 = arith.mulf %119, %121 : vector<16x128xf32>
    %c0_63 = arith.constant 0 : index
    %c0_64 = arith.constant 0 : index
    %123 = vector.load %arg6[%c0_63, %c0_64] : memref<1x128xf32, #tpu.memory_space<vmem>>, vector<1x128xf32>
    %124 = vector.broadcast %123 : vector<1x128xf32> to vector<16x128xf32>
    %125 = arith.addf %122, %124 : vector<16x128xf32>
    %126 = vector.shape_cast %125 : vector<16x128xf32> to vector<8x2x128xf32>
    %127 = arith.addf %126, %40 : vector<8x2x128xf32>
    %cst_65 = arith.constant 0.000000e+00 : f32
    %128 = vector.broadcast %cst_65 : f32 to vector<8x2x128xf32>
    %129 = arith.maximumf %127, %128 : vector<8x2x128xf32>
    %c0_66 = arith.constant 0 : index
    %c0_67 = arith.constant 0 : index
    %c0_68 = arith.constant 0 : index
    %130 = vector.load %arg7[%c0_66, %c0_67, %c0_68] : memref<8x2x128xf32, #tpu.memory_space<vmem>>, vector<8x2x128xf32>
    tpu.vector_store %arg7[%c0_66, %c0_67, %c0_68], %129 {strides = array<i32>} : memref<8x2x128xf32, #tpu.memory_space<vmem>>, vector<8x2x128xf32>,
    return
  }
}

</mosaic_0001>

<llo_original>
// kernel: resblock_pallas.1
$region0: #{resblock_pallas.1}
  #allocation0 [shape = 'u32[]', space=smem, size = 0x4, offset = 0x4, fixed_abs, tag = 'smem constant byte address 0x4 - core index']
  #allocation1 [shape = 'u32[144,128]{1,0:T(1,128)}', space=vmem, size = 0x12000, scoped, tag = 'internal scratch']
  #allocation2 [shape = 'f32[10,2,128]{2,1,0:T(2,128)}', space=vmem, size = 0x2800, scoped, tag = 'scratch operand']
  %s0 = inlined_call_operand.vmem [shape: f32[8,2,128], index: 0, kind: input, shape index: {}]
  %s1 = inlined_call_operand.vmem [shape: bf16[384,128], index: 1, kind: input, shape index: {}]
  %s2 = inlined_call_operand.vmem [shape: bf16[384,128], index: 2, kind: input, shape index: {}]
  %s3 = inlined_call_operand.vmem [shape: f32[1,128], index: 3, kind: input, shape index: {}]
  %s4 = inlined_call_operand.vmem [shape: f32[1,128], index: 4, kind: input, shape index: {}]
  %s5 = inlined_call_operand.vmem [shape: f32[1,128], index: 5, kind: input, shape index: {}]
  %s6 = inlined_call_operand.vmem [shape: f32[1,128], index: 6, kind: input, shape index: {}]
  %s7 = inlined_call_operand.vmem [shape: f32[8,2,128], index: 7, kind: output, shape index: {}]
  %s8 = sld [smem:[#allocation0]]
  $region38: #{resblock_pallas.1} parent=0
    _
  %s10 = ssub.s32 1, %s8
  %s11 = scalar_select 0, %s10, %s8
  // Predicated region
  $region2: #{resblock_pallas.1} parent=0 // pred_check
    _
  $region3: #{resblock_pallas.1} parent=0 // pred_check_branch
    %13 = sbr.rel (0) target = $region5
  $region4: #{resblock_pallas.1} parent=0 // pred_region
    _
  $region5: #{resblock_pallas.1} parent=0 // pred_fallthru
    _
  // Predicated region
  $region6: #{resblock_pallas.1} parent=0 // pred_check
    _
  $region7: #{resblock_pallas.1} parent=0 // pred_check_branch
    %15 = sbr.rel (0) target = $region9
  $region8: #{resblock_pallas.1} parent=0 // pred_region
    _
  $region9: #{resblock_pallas.1} parent=0 // pred_fallthru
    _
  // Predicated region
  $region10: #{resblock_pallas.1} parent=0 // pred_check
    _
  $region11: #{resblock_pallas.1} parent=0 // pred_check_branch
    %17 = sbr.rel (0) target = $region13
  $region12: #{resblock_pallas.1} parent=0 // pred_region
    _
  $region13: #{resblock_pallas.1} parent=0 // pred_fallthru
    _
  // Predicated region
  $region14: #{resblock_pallas.1} parent=0 // pred_check
    _
  $region15: #{resblock_pallas.1} parent=0 // pred_check_branch
    %19 = sbr.rel (0) target = $region17
  $region16: #{resblock_pallas.1} parent=0 // pred_region
    _
  $region17: #{resblock_pallas.1} parent=0 // pred_fallthru
    _
  // Predicated region
  $region18: #{resblock_pallas.1} parent=0 // pred_check
    _
  $region19: #{resblock_pallas.1} parent=0 // pred_check_branch
    %21 = sbr.rel (0) target = $region21
  $region20: #{resblock_pallas.1} parent=0 // pred_region
    _
  $region21: #{resblock_pallas.1} parent=0 // pred_fallthru
    _
  // Predicated region
  $region22: #{resblock_pallas.1} parent=0 // pred_check
    _
  $region23: #{resblock_pallas.1} parent=0 // pred_check_branch
    %23 = sbr.rel (0) target = $region25
  $region24: #{resblock_pallas.1} parent=0 // pred_region
    _
  $region25: #{resblock_pallas.1} parent=0 // pred_fallthru
    _
  // Predicated region
  $region26: #{resblock_pallas.1} parent=0 // pred_check
    _
  $region27: #{resblock_pallas.1} parent=0 // pred_check_branch
    %25 = sbr.rel (0) target = $region29
  $region28: #{resblock_pallas.1} parent=0 // pred_region
    _
  $region29: #{resblock_pallas.1} parent=0 // pred_fallthru
    _
  %v27 = vlaneseq
  %v28 = vshrl.u32 %v27, 7
  %v29 = vadd.s32 %v28, 8
  %v30 = vadd.s32 %v28, 16
  %v31 = vadd.s32 %v28, 24
  %v32 = vadd.s32 %v28, 32
  %v33 = vadd.s32 %v28, 40
  %v34 = vadd.s32 %v28, 48
  %v35 = vadd.s32 %v28, 56
  %v36 = vadd.s32 %v28, 64
  %v37 = vadd.s32 %v28, 72
  %v38 = vadd.s32 %v28, 80
  %v39 = vadd.s32 %v28, 88
  %v40 = vadd.s32 %v28, 96
  %v41 = vadd.s32 %v28, 104
  %v42 = vadd.s32 %v28, 112
  %v43 = vadd.s32 %v28, 120
  %v44 = vlaneseq
  %v45 = vand.u32 %v44, 127
  %vm46 = vcmp.lt.s32.totalorder %v28, 0
  %v47 = vsub.s32 0, %v28
  %v48 = vsel %vm46, %v47, %v28
  %v49 = vshrl.u32 %v48, 2
  %v50 = vand.u32 %v48, 3
  %v51 = vsub.s32 0, %v50
  %v52 = vsel %vm46, %v51, %v50
  %vm53 = vcmp.lt.s32.totalorder %v29, 0
  %v54 = vsub.s32 0, %v29
  %v55 = vsel %vm53, %v54, %v29
  %v56 = vshrl.u32 %v55, 2
  %v57 = vand.u32 %v55, 3
  %v58 = vsub.s32 0, %v57
  %v59 = vsel %vm53, %v58, %v57
  %vm60 = vcmp.lt.s32.totalorder %v30, 0
  %v61 = vsub.s32 0, %v30
  %v62 = vsel %vm60, %v61, %v30
  %v63 = vshrl.u32 %v62, 2
  %v64 = vand.u32 %v62, 3
  %v65 = vsub.s32 0, %v64
  %v66 = vsel %vm60, %v65, %v64
  %vm67 = vcmp.lt.s32.totalorder %v31, 0
  %v68 = vsub.s32 0, %v31
  %v69 = vsel %vm67, %v68, %v31
  %v70 = vshrl.u32 %v69, 2
  %v71 = vand.u32 %v69, 3
  %v72 = vsub.s32 0, %v71
  %v73 = vsel %vm67, %v72, %v71
  %vm74 = vcmp.lt.s32.totalorder %v32, 0
  %v75 = vsub.s32 0, %v32
  %v76 = vsel %vm74, %v75, %v32
  %v77 = vshrl.u32 %v76, 2
  %v78 = vand.u32 %v76, 3
  %v79 = vsub.s32 0, %v78
  %v80 = vsel %vm74, %v79, %v78
  %vm81 = vcmp.lt.s32.totalorder %v33, 0
  %v82 = vsub.s32 0, %v33
  %v83 = vsel %vm81, %v82, %v33
  %v84 = vshrl.u32 %v83, 2
  %v85 = vand.u32 %v83, 3
  %v86 = vsub.s32 0, %v85
  %v87 = vsel %vm81, %v86, %v85
  %vm88 = vcmp.lt.s32.totalorder %v34, 0
  %v89 = vsub.s32 0, %v34
  %v90 = vsel %vm88, %v89, %v34
  %v91 = vshrl.u32 %v90, 2
  %v92 = vand.u32 %v90, 3
  %v93 = vsub.s32 0, %v92
  %v94 = vsel %vm88, %v93, %v92
  %vm95 = vcmp.lt.s32.totalorder %v35, 0
  %v96 = vsub.s32 0, %v35
  %v97 = vsel %vm95, %v96, %v35
  %v98 = vshrl.u32 %v97, 2
  %v99 = vand.u32 %v97, 3
  %v100 = vsub.s32 0, %v99
  %v101 = vsel %vm95, %v100, %v99
  %vm102 = vcmp.lt.s32.totalorder %v36, 0
  %v103 = vsub.s32 0, %v36
  %v104 = vsel %vm102, %v103, %v36
  %v105 = vshrl.u32 %v104, 2
  %v106 = vand.u32 %v104, 3
  %v107 = vsub.s32 0, %v106
  %v108 = vsel %vm102, %v107, %v106
  %vm109 = vcmp.lt.s32.totalorder %v37, 0
  %v110 = vsub.s32 0, %v37
  %v111 = vsel %vm109, %v110, %v37
  %v112 = vshrl.u32 %v111, 2
  %v113 = vand.u32 %v111, 3
  %v114 = vsub.s32 0, %v113
  %v115 = vsel %vm109, %v114, %v113
  %vm116 = vcmp.lt.s32.totalorder %v38, 0
  %v117 = vsub.s32 0, %v38
  %v118 = vsel %vm116, %v117, %v38
  %v119 = vshrl.u32 %v118, 2
  %v120 = vand.u32 %v118, 3
  %v121 = vsub.s32 0, %v120
  %v122 = vsel %vm116, %v121, %v120
  %vm123 = vcmp.lt.s32.totalorder %v39, 0
  %v124 = vsub.s32 0, %v39
  %v125 = vsel %vm123, %v124, %v39
  %v126 = vshrl.u32 %v125, 2
  %v127 = vand.u32 %v125, 3
  %v128 = vsub.s32 0, %v127
  %v129 = vsel %vm123, %v128, %v127
  %vm130 = vcmp.lt.s32.totalorder %v40, 0
  %v131 = vsub.s32 0, %v40
  %v132 = vsel %vm130, %v131, %v40
  %v133 = vshrl.u32 %v132, 2
  %v134 = vand.u32 %v132, 3
  %v135 = vsub.s32 0, %v134
  %v136 = vsel %vm130, %v135, %v134
  %vm137 = vcmp.lt.s32.totalorder %v41, 0
  %v138 = vsub.s32 0, %v41
  %v139 = vsel %vm137, %v138, %v41
  %v140 = vshrl.u32 %v139, 2
  %v141 = vand.u32 %v139, 3
  %v142 = vsub.s32 0, %v141
  %v143 = vsel %vm137, %v142, %v141
  %vm144 = vcmp.lt.s32.totalorder %v42, 0
  %v145 = vsub.s32 0, %v42
  %v146 = vsel %vm144, %v145, %v42
  %v147 = vshrl.u32 %v146, 2
  %v148 = vand.u32 %v146, 3
  %v149 = vsub.s32 0, %v148
  %v150 = vsel %vm144, %v149, %v148
  %vm151 = vcmp.lt.s32.totalorder %v43, 0
  %v152 = vsub.s32 0, %v43
  %v153 = vsel %vm151, %v152, %v43
  %v154 = vshrl.u32 %v153, 2
  %v155 = vand.u32 %v153, 3
  %v156 = vsub.s32 0, %v155
  %v157 = vsel %vm151, %v156, %v155
  %vm158 = vcmp.ne.s32.totalorder %v52, 0
  %vm159 = vcmp.ne.s32.totalorder %v59, 0
  %vm160 = vcmp.ne.s32.totalorder %v66, 0
  %vm161 = vcmp.ne.s32.totalorder %v73, 0
  %vm162 = vcmp.ne.s32.totalorder %v80, 0
  %vm163 = vcmp.ne.s32.totalorder %v87, 0
  %vm164 = vcmp.ne.s32.totalorder %v94, 0
  %vm165 = vcmp.ne.s32.totalorder %v101, 0
  %vm166 = vcmp.ne.s32.totalorder %v108, 0
  %vm167 = vcmp.ne.s32.totalorder %v115, 0
  %vm168 = vcmp.ne.s32.totalorder %v122, 0
  %vm169 = vcmp.ne.s32.totalorder %v129, 0
  %vm170 = vcmp.ne.s32.totalorder %v136, 0
  %vm171 = vcmp.ne.s32.totalorder %v143, 0
  %vm172 = vcmp.ne.s32.totalorder %v150, 0
  %vm173 = vcmp.ne.s32.totalorder %v157, 0
  %vm174 = vcmp.lt.s32.totalorder %v52, 0
  %vm175 = vcmp.lt.s32.totalorder %v59, 0
  %vm176 = vcmp.lt.s32.totalorder %v66, 0
  %vm177 = vcmp.lt.s32.totalorder %v73, 0
  %vm178 = vcmp.lt.s32.totalorder %v80, 0
  %vm179 = vcmp.lt.s32.totalorder %v87, 0
  %vm180 = vcmp.lt.s32.totalorder %v94, 0
  %vm181 = vcmp.lt.s32.totalorder %v101, 0
  %vm182 = vcmp.lt.s32.totalorder %v108, 0
  %vm183 = vcmp.lt.s32.totalorder %v115, 0
  %vm184 = vcmp.lt.s32.totalorder %v122, 0
  %vm185 = vcmp.lt.s32.totalorder %v129, 0
  %vm186 = vcmp.lt.s32.totalorder %v136, 0
  %vm187 = vcmp.lt.s32.totalorder %v143, 0
  %vm188 = vcmp.lt.s32.totalorder %v150, 0
  %vm189 = vcmp.lt.s32.totalorder %v157, 0
  %vm190 = vmand %vm174, %vm158
  %vm191 = vmand %vm175, %vm159
  %vm192 = vmand %vm176, %vm160
  %vm193 = vmand %vm177, %vm161
  %vm194 = vmand %vm178, %vm162
  %vm195 = vmand %vm179, %vm163
  %vm196 = vmand %vm180, %vm164
  %vm197 = vmand %vm181, %vm165
  %vm198 = vmand %vm182, %vm166
  %vm199 = vmand %vm183, %vm167
  %vm200 = vmand %vm184, %vm168
  %vm201 = vmand %vm185, %vm169
  %vm202 = vmand %vm186, %vm170
  %vm203 = vmand %vm187, %vm171
  %vm204 = vmand %vm188, %vm172
  %vm205 = vmand %vm189, %vm173
  %v206 = vadd.s32 %v52, 4
  %v207 = vadd.s32 %v59, 4
  %v208 = vadd.s32 %v66, 4
  %v209 = vadd.s32 %v73, 4
  %v210 = vadd.s32 %v80, 4
  %v211 = vadd.s32 %v87, 4
  %v212 = vadd.s32 %v94, 4
  %v213 = vadd.s32 %v101, 4
  %v214 = vadd.s32 %v108, 4
  %v215 = vadd.s32 %v115, 4
  %v216 = vadd.s32 %v122, 4
  %v217 = vadd.s32 %v129, 4
  %v218 = vadd.s32 %v136, 4
  %v219 = vadd.s32 %v143, 4
  %v220 = vadd.s32 %v150, 4
  %v221 = vadd.s32 %v157, 4
  %v222 = vsel %vm190, %v206, %v52
  %v223 = vsel %vm191, %v207, %v59
  %v224 = vsel %vm192, %v208, %v66
  %v225 = vsel %vm193, %v209, %v73
  %v226 = vsel %vm194, %v210, %v80
  %v227 = vsel %vm195, %v211, %v87
  %v228 = vsel %vm196, %v212, %v94
  %v229 = vsel %vm197, %v213, %v101
  %v230 = vsel %vm198, %v214, %v108
  %v231 = vsel %vm199, %v215, %v115
  %v232 = vsel %vm200, %v216, %v122
  %v233 = vsel %vm201, %v217, %v129
  %v234 = vsel %vm202, %v218, %v136
  %v235 = vsel %vm203, %v219, %v143
  %v236 = vsel %vm204, %v220, %v150
  %v237 = vsel %vm205, %v221, %v157
  %vm238 = vcmp.lt.s32.totalorder %v45, 0
  %v239 = vsub.s32 0, %v45
  %v240 = vsel %vm238, %v239, %v45
  %v241 = vshrl.u32 %v240, 2
  %v242 = vand.u32 %v240, 3
  %v243 = vsub.s32 0, %v242
  %v244 = vsel %vm238, %v243, %v242
  %vm245 = vcmp.ne.s32.totalorder %v244, 0
  %vm246 = vcmp.lt.s32.totalorder %v244, 0
  %vm247 = vmand %vm246, %vm245
  %v248 = vadd.s32 %v244, 4
  %v249 = vsel %vm247, %v248, %v244
  %vm250 = vcmp.eq.s32.totalorder %v222, %v249
  %vm251 = vcmp.eq.s32.totalorder %v223, %v249
  %vm252 = vcmp.eq.s32.totalorder %v224, %v249
  %vm253 = vcmp.eq.s32.totalorder %v225, %v249
  %vm254 = vcmp.eq.s32.totalorder %v226, %v249
  %vm255 = vcmp.eq.s32.totalorder %v227, %v249
  %vm256 = vcmp.eq.s32.totalorder %v228, %v249
  %vm257 = vcmp.eq.s32.totalorder %v229, %v249
  %vm258 = vcmp.eq.s32.totalorder %v230, %v249
  %vm259 = vcmp.eq.s32.totalorder %v231, %v249
  %vm260 = vcmp.eq.s32.totalorder %v232, %v249
  %vm261 = vcmp.eq.s32.totalorder %v233, %v249
  %vm262 = vcmp.eq.s32.totalorder %v234, %v249
  %vm263 = vcmp.eq.s32.totalorder %v235, %v249
  %vm264 = vcmp.eq.s32.totalorder %v236, %v249
  %vm265 = vcmp.eq.s32.totalorder %v237, %v249
  %v266 = vsel %vm250, 1, 0
  %v267 = vsel %vm251, 1, 0
  %v268 = vsel %vm252, 1, 0
  %v269 = vsel %vm253, 1, 0
  %v270 = vsel %vm254, 1, 0
  %v271 = vsel %vm255, 1, 0
  %v272 = vsel %vm256, 1, 0
  %v273 = vsel %vm257, 1, 0
  %v274 = vsel %vm258, 1, 0
  %v275 = vsel %vm259, 1, 0
  %v276 = vsel %vm260, 1, 0
  %v277 = vsel %vm261, 1, 0
  %v278 = vsel %vm262, 1, 0
  %v279 = vsel %vm263, 1, 0
  %v280 = vsel %vm264, 1, 0
  %v281 = vsel %vm265, 1, 0
  %v282 = vcvt.s32.f32 %v266
  %v283 = vcvt.s32.f32 %v267
  %v284 = vcvt.s32.f32 %v268
  %v285 = vcvt.s32.f32 %v269
  %v286 = vcvt.s32.f32 %v270
  %v287 = vcvt.s32.f32 %v271
  %v288 = vcvt.s32.f32 %v272
  %v289 = vcvt.s32.f32 %v273
  %v290 = vcvt.s32.f32 %v274
  %v291 = vcvt.s32.f32 %v275
  %v292 = vcvt.s32.f32 %v276
  %v293 = vcvt.s32.f32 %v277
  %v294 = vcvt.s32.f32 %v278
  %v295 = vcvt.s32.f32 %v279
  %v296 = vcvt.s32.f32 %v280
  %v297 = vcvt.s32.f32 %v281
  %298 = vst [vmem:[#allocation2] sm:$0x3] 0.0
  %s299 = scalar_lea.vmem [#allocation2], 18
  %300 = vst [vmem:[%s299] sm:$0x3] 0.0
  %v301 = vld [vmem:[%s0] sm:$0x3]
  %v302 = vld [vmem:[%s0 + $0x2] sm:$0x3]
  %v303 = vld [vmem:[%s0 + $0x4] sm:$0x3]
  %v304 = vld [vmem:[%s0 + $0x6] sm:$0x3]
  %v305 = vld [vmem:[%s0 + $0x8] sm:$0x3]
  %v306 = vld [vmem:[%s0 + $0xa] sm:$0x3]
  %v307 = vld [vmem:[%s0 + $0xc] sm:$0x3]
  %v308 = vld [vmem:[%s0 + $0xe] sm:$0x3]
  %s309 = scalar_lea.vmem [#allocation2], 2
  %310 = vst [vmem:[%s309] sm:$0x3] %v301
  %311 = vst [vmem:[%s309 + $0x2] sm:$0x3] %v302
  %312 = vst [vmem:[%s309 + $0x4] sm:$0x3] %v303
  %313 = vst [vmem:[%s309 + $0x6] sm:$0x3] %v304
  %314 = vst [vmem:[%s309 + $0x8] sm:$0x3] %v305
  %315 = vst [vmem:[%s309 + $0xa] sm:$0x3] %v306
  %316 = vst [vmem:[%s309 + $0xc] sm:$0x3] %v307
  %317 = vst [vmem:[%s309 + $0xe] sm:$0x3] %v308
  %v318 = vld [vmem:[#allocation2] sm:$0x3]
  %v319 = vld [vmem:[#allocation2 + $0x2] sm:$0x3]
  %v320 = vld [vmem:[#allocation2 + $0x4] sm:$0x3]
  %v321 = vld [vmem:[#allocation2 + $0x6] sm:$0x3]
  %v322 = vld [vmem:[#allocation2 + $0x8] sm:$0x3]
  %v323 = vld [vmem:[#allocation2 + $0xa] sm:$0x3]
  %v324 = vld [vmem:[#allocation2 + $0xc] sm:$0x3]
  %v325 = vld [vmem:[#allocation2 + $0xe] sm:$0x3]
  %v334 = vcombine.low %v318, %v319
  %v335 = vcombine.low %v320, %v321
  %v337 = vunpack.c.l.s4 1983009808
  %v338 = vunpack.c.0.s8 %v337
  %v339 = vlaneseq
  %v340 = vshrl.u32 %v339, 7
  %v341 = vsub.s32 %v338, %v340
  %v342 = vrot.slane %v334, %v341
  %v344 = vunpack.c.l.s4 1983009808
  %v345 = vunpack.c.0.s8 %v344
  %v346 = vlaneseq
  %v347 = vshrl.u32 %v346, 7
  %v348 = vsub.s32 %v345, %v347
  %v349 = vrot.slane %v335, %v348
  %v350 = vcombine.low %v342, %v349
  %v351 = vcombine.low %v322, %v323
  %v352 = vcombine.low %v324, %v325
  %v354 = vunpack.c.l.s4 1983009808
  %v355 = vunpack.c.0.s8 %v354
  %v356 = vlaneseq
  %v357 = vshrl.u32 %v356, 7
  %v358 = vsub.s32 %v355, %v357
  %v359 = vrot.slane %v351, %v358
  %v361 = vunpack.c.l.s4 1983009808
  %v362 = vunpack.c.0.s8 %v361
  %v363 = vlaneseq
  %v364 = vshrl.u32 %v363, 7
  %v365 = vsub.s32 %v362, %v364
  %v366 = vrot.slane %v352, %v365
  %v367 = vcombine.low %v359, %v366
  %v370 = vpack.c.bf16 %v367, %v350
  %v371 = vld [vmem:[%s309] sm:$0x3]
  %v372 = vld [vmem:[%s309 + $0x2] sm:$0x3]
  %v373 = vld [vmem:[%s309 + $0x4] sm:$0x3]
  %v374 = vld [vmem:[%s309 + $0x6] sm:$0x3]
  %v375 = vld [vmem:[%s309 + $0x8] sm:$0x3]
  %v376 = vld [vmem:[%s309 + $0xa] sm:$0x3]
  %v377 = vld [vmem:[%s309 + $0xc] sm:$0x3]
  %v378 = vld [vmem:[%s309 + $0xe] sm:$0x3]
  %v387 = vcombine.low %v371, %v372
  %v388 = vcombine.low %v373, %v374
  %v390 = vunpack.c.l.s4 1983009808
  %v391 = vunpack.c.0.s8 %v390
  %v392 = vlaneseq
  %v393 = vshrl.u32 %v392, 7
  %v394 = vsub.s32 %v391, %v393
  %v395 = vrot.slane %v387, %v394
  %v397 = vunpack.c.l.s4 1983009808
  %v398 = vunpack.c.0.s8 %v397
  %v399 = vlaneseq
  %v400 = vshrl.u32 %v399, 7
  %v401 = vsub.s32 %v398, %v400
  %v402 = vrot.slane %v388, %v401
  %v403 = vcombine.low %v395, %v402
  %v404 = vcombine.low %v375, %v376
  %v405 = vcombine.low %v377, %v378
  %v407 = vunpack.c.l.s4 1983009808
  %v408 = vunpack.c.0.s8 %v407
  %v409 = vlaneseq
  %v410 = vshrl.u32 %v409, 7
  %v411 = vsub.s32 %v408, %v410
  %v412 = vrot.slane %v404, %v411
  %v414 = vunpack.c.l.s4 1983009808
  %v415 = vunpack.c.0.s8 %v414
  %v416 = vlaneseq
  %v417 = vshrl.u32 %v416, 7
  %v418 = vsub.s32 %v415, %v417
  %v419 = vrot.slane %v405, %v418
  %v420 = vcombine.low %v412, %v419
  %v423 = vpack.c.bf16 %v420, %v403
  %s424 = scalar_lea.vmem [#allocation2], 4
  %v425 = vld [vmem:[%s424] sm:$0x3]
  %v426 = vld [vmem:[%s424 + $0x2] sm:$0x3]
  %v427 = vld [vmem:[%s424 + $0x4] sm:$0x3]
  %v428 = vld [vmem:[%s424 + $0x6] sm:$0x3]
  %v429 = vld [vmem:[%s424 + $0x8] sm:$0x3]
  %v430 = vld [vmem:[%s424 + $0xa] sm:$0x3]
  %v431 = vld [vmem:[%s424 + $0xc] sm:$0x3]
  %v432 = vld [vmem:[%s424 + $0xe] sm:$0x3]
  %v441 = vcombine.low %v425, %v426
  %v442 = vcombine.low %v427, %v428
  %v444 = vunpack.c.l.s4 1983009808
  %v445 = vunpack.c.0.s8 %v444
  %v446 = vlaneseq
  %v447 = vshrl.u32 %v446, 7
  %v448 = vsub.s32 %v445, %v447
  %v449 = vrot.slane %v441, %v448
  %v451 = vunpack.c.l.s4 1983009808
  %v452 = vunpack.c.0.s8 %v451
  %v453 = vlaneseq
  %v454 = vshrl.u32 %v453, 7
  %v455 = vsub.s32 %v452, %v454
  %v456 = vrot.slane %v442, %v455
  %v457 = vcombine.low %v449, %v456
  %v458 = vcombine.low %v429, %v430
  %v459 = vcombine.low %v431, %v432
  %v461 = vunpack.c.l.s4 1983009808
  %v462 = vunpack.c.0.s8 %v461
  %v463 = vlaneseq
  %v464 = vshrl.u32 %v463, 7
  %v465 = vsub.s32 %v462, %v464
  %v466 = vrot.slane %v458, %v465
  %v468 = vunpack.c.l.s4 1983009808
  %v469 = vunpack.c.0.s8 %v468
  %v470 = vlaneseq
  %v471 = vshrl.u32 %v470, 7
  %v472 = vsub.s32 %v469, %v471
  %v473 = vrot.slane %v459, %v472
  %v474 = vcombine.low %v466, %v473
  %v477 = vpack.c.bf16 %v474, %v457
  %v478 = vld [vmem:[%s1] sm:$0xf]
  %v479 = vld [vmem:[%s1 + $0x4] sm:$0xf]
  %v480 = vld [vmem:[%s1 + $0x8] sm:$0xf]
  %v481 = vld [vmem:[%s1 + $0xc] sm:$0xf]
  %v482 = vld [vmem:[%s1 + $0x10] sm:$0xf]
  %v483 = vld [vmem:[%s1 + $0x14] sm:$0xf]
  %v484 = vld [vmem:[%s1 + $0x18] sm:$0xf]
  %v485 = vld [vmem:[%s1 + $0x1c] sm:$0xf]
  %v486 = vld [vmem:[%s1 + $0x20] sm:$0xf]
  %v487 = vld [vmem:[%s1 + $0x24] sm:$0xf]
  %v488 = vld [vmem:[%s1 + $0x28] sm:$0xf]
  %v489 = vld [vmem:[%s1 + $0x2c] sm:$0xf]
  %v490 = vld [vmem:[%s1 + $0x30] sm:$0xf]
  %v491 = vld [vmem:[%s1 + $0x34] sm:$0xf]
  %v492 = vld [vmem:[%s1 + $0x38] sm:$0xf]
  %v493 = vld [vmem:[%s1 + $0x3c] sm:$0xf]
  %v494 = vld [vmem:[%s1 + $0x40] sm:$0xf]
  %v495 = vld [vmem:[%s1 + $0x44] sm:$0xf]
  %v496 = vld [vmem:[%s1 + $0x48] sm:$0xf]
  %v497 = vld [vmem:[%s1 + $0x4c] sm:$0xf]
  %v498 = vld [vmem:[%s1 + $0x50] sm:$0xf]
  %v499 = vld [vmem:[%s1 + $0x54] sm:$0xf]
  %v500 = vld [vmem:[%s1 + $0x58] sm:$0xf]
  %v501 = vld [vmem:[%s1 + $0x5c] sm:$0xf]
  %v502 = vld [vmem:[%s1 + $0x60] sm:$0xf]
  %v503 = vld [vmem:[%s1 + $0x64] sm:$0xf]
  %v504 = vld [vmem:[%s1 + $0x68] sm:$0xf]
  %v505 = vld [vmem:[%s1 + $0x6c] sm:$0xf]
  %v506 = vld [vmem:[%s1 + $0x70] sm:$0xf]
  %v507 = vld [vmem:[%s1 + $0x74] sm:$0xf]
  %v508 = vld [vmem:[%s1 + $0x78] sm:$0xf]
  %v509 = vld [vmem:[%s1 + $0x7c] sm:$0xf]
  %v510 = vld [vmem:[%s1 + $0x80] sm:$0xf]
  %v511 = vld [vmem:[%s1 + $0x84] sm:$0xf]
  %v512 = vld [vmem:[%s1 + $0x88] sm:$0xf]
  %v513 = vld [vmem:[%s1 + $0x8c] sm:$0xf]
  %v514 = vld [vmem:[%s1 + $0x90] sm:$0xf]
  %v515 = vld [vmem:[%s1 + $0x94] sm:$0xf]
  %v516 = vld [vmem:[%s1 + $0x98] sm:$0xf]
  %v517 = vld [vmem:[%s1 + $0x9c] sm:$0xf]
  %v518 = vld [vmem:[%s1 + $0xa0] sm:$0xf]
  %v519 = vld [vmem:[%s1 + $0xa4] sm:$0xf]
  %v520 = vld [vmem:[%s1 + $0xa8] sm:$0xf]
  %v521 = vld [vmem:[%s1 + $0xac] sm:$0xf]
  %v522 = vld [vmem:[%s1 + $0xb0] sm:$0xf]
  %v523 = vld [vmem:[%s1 + $0xb4] sm:$0xf]
  %v524 = vld [vmem:[%s1 + $0xb8] sm:$0xf]
  %v525 = vld [vmem:[%s1 + $0xbc] sm:$0xf]
  %v574 = vunpack.c.l.b16 %v478
  %v575 = vunpack.c.l.b16 %v479
  %v576 = vunpack.c.l.b16 %v480
  %v577 = vunpack.c.l.b16 %v481
  %v578 = vunpack.c.l.b16 %v482
  %v579 = vunpack.c.l.b16 %v483
  %v580 = vunpack.c.l.b16 %v484
  %v581 = vunpack.c.l.b16 %v485
  %v582 = vunpack.c.l.b16 %v486
  %v583 = vunpack.c.l.b16 %v487
  %v584 = vunpack.c.l.b16 %v488
  %v585 = vunpack.c.l.b16 %v489
  %v586 = vunpack.c.l.b16 %v490
  %v587 = vunpack.c.l.b16 %v491
  %v588 = vunpack.c.l.b16 %v492
  %v589 = vunpack.c.l.b16 %v493
  %v590 = vunpack.c.l.b16 %v494
  %v591 = vunpack.c.l.b16 %v495
  %v592 = vunpack.c.l.b16 %v496
  %v593 = vunpack.c.l.b16 %v497
  %v594 = vunpack.c.l.b16 %v498
  %v595 = vunpack.c.l.b16 %v499
  %v596 = vunpack.c.l.b16 %v500
  %v597 = vunpack.c.l.b16 %v501
  %v598 = vunpack.c.l.b16 %v502
  %v599 = vunpack.c.l.b16 %v503
  %v600 = vunpack.c.l.b16 %v504
  %v601 = vunpack.c.l.b16 %v505
  %v602 = vunpack.c.l.b16 %v506
  %v603 = vunpack.c.l.b16 %v507
  %v604 = vunpack.c.l.b16 %v508
  %v605 = vunpack.c.l.b16 %v509
  %v606 = vunpack.c.l.b16 %v510
  %v607 = vunpack.c.l.b16 %v511
  %v608 = vunpack.c.l.b16 %v512
  %v609 = vunpack.c.l.b16 %v513
  %v610 = vunpack.c.l.b16 %v514
  %v611 = vunpack.c.l.b16 %v515
  %v612 = vunpack.c.l.b16 %v516
  %v613 = vunpack.c.l.b16 %v517
  %v614 = vunpack.c.l.b16 %v518
  %v615 = vunpack.c.l.b16 %v519
  %v616 = vunpack.c.l.b16 %v520
  %v617 = vunpack.c.l.b16 %v521
  %v618 = vunpack.c.l.b16 %v522
  %v619 = vunpack.c.l.b16 %v523
  %v620 = vunpack.c.l.b16 %v524
  %v621 = vunpack.c.l.b16 %v525
  %v622 = vpack.c.b16 %v575, %v574
  %v623 = vpack.c.b16 %v577, %v576
  %v624 = vpack.c.b16 %v579, %v578
  %v625 = vpack.c.b16 %v581, %v580
  %v626 = vpack.c.b16 %v583, %v582
  %v627 = vpack.c.b16 %v585, %v584
  %v628 = vpack.c.b16 %v587, %v586
  %v629 = vpack.c.b16 %v589, %v588
  %v630 = vpack.c.b16 %v591, %v590
  %v631 = vpack.c.b16 %v593, %v592
  %v632 = vpack.c.b16 %v595, %v594
  %v633 = vpack.c.b16 %v597, %v596
  %v634 = vpack.c.b16 %v599, %v598
  %v635 = vpack.c.b16 %v601, %v600
  %v636 = vpack.c.b16 %v603, %v602
  %v637 = vpack.c.b16 %v605, %v604
  %v638 = vpack.c.b16 %v607, %v606
  %v639 = vpack.c.b16 %v609, %v608
  %v640 = vpack.c.b16 %v611, %v610
  %v641 = vpack.c.b16 %v613, %v612
  %v642 = vpack.c.b16 %v615, %v614
  %v643 = vpack.c.b16 %v617, %v616
  %v644 = vpack.c.b16 %v619, %v618
  %v645 = vpack.c.b16 %v621, %v620
  %670 = vmatprep.subr.bf16.mxu0 0
  %671 = vmatpush1.bf16.msra.mxu0 %v622
  %672 = vmatprep.subr.bf16.mxu0 0
  %673 = vmatpush1.bf16.msra.mxu0 %v623
  %674 = vmatprep.subr.bf16.mxu0 0
  %675 = vmatpush1.bf16.msra.mxu0 %v624
  %676 = vmatprep.subr.bf16.mxu0 0
  %677 = vmatpush1.bf16.msra.mxu0 %v625
  %678 = vmatprep.subr.bf16.mxu0 0
  %679 = vmatpush1.bf16.msra.mxu0 %v626
  %680 = vmatprep.subr.bf16.mxu0 0
  %681 = vmatpush1.bf16.msra.mxu0 %v627
  %682 = vmatprep.subr.bf16.mxu0 0
  %683 = vmatpush1.bf16.msra.mxu0 %v628
  %684 = vmatprep.subr.bf16.mxu0 0
  %685 = vmatpush1.bf16.msra.mxu0 %v629
  %686 = vmatprep.subr.bf16.mxu0 0
  %687 = vmatpush1.bf16.msra.mxu0 %v630
  %688 = vmatprep.subr.bf16.mxu0 0
  %689 = vmatpush1.bf16.msra.mxu0 %v631
  %690 = vmatprep.subr.bf16.mxu0 0
  %691 = vmatpush1.bf16.msra.mxu0 %v632
  %692 = vmatprep.subr.bf16.mxu0 0
  %693 = vmatpush1.bf16.msra.mxu0 %v633
  %694 = vmatprep.subr.bf16.mxu0 0
  %695 = vmatpush1.bf16.msra.mxu0 %v634
  %696 = vmatprep.subr.bf16.mxu0 0
  %697 = vmatpush1.bf16.msra.mxu0 %v635
  %698 = vmatprep.subr.bf16.mxu0 0
  %699 = vmatpush1.bf16.msra.mxu0 %v636
  %700 = vmatprep.subr.bf16.mxu0 0
  %701 = vmatpush1.bf16.msra.mxu0 %v637
  %702 = vmatprep.mubr.bf16.mxu0 %v423
  %703 = vmatmul.mubr.bf16.gmra.mrb[0].mxu0 %v370
  %v704 = vpop.f32.mrb[0].mxu0
  %v705 = vadd.f32 0.0, %v704
  %v706 = vpop.f32.mrb[0].mxu0
  %v707 = vpop.f32.mrb[0].mxu0
  %v708 = vadd.f32 0.0, %v707
  %v709 = vpop.f32.mrb[0].mxu0
  %710 = vdwg.mxu0
  %711 = vmatprep.subr.bf16.mxu0 0
  %712 = vmatpush1.bf16.msra.mxu0 %v638
  %713 = vmatprep.subr.bf16.mxu0 0
  %714 = vmatpush1.bf16.msra.mxu0 %v639
  %715 = vmatprep.subr.bf16.mxu0 0
  %716 = vmatpush1.bf16.msra.mxu0 %v640
  %717 = vmatprep.subr.bf16.mxu0 0
  %718 = vmatpush1.bf16.msra.mxu0 %v641
  %719 = vmatprep.subr.bf16.mxu0 0
  %720 = vmatpush1.bf16.msra.mxu0 %v642
  %721 = vmatprep.subr.bf16.mxu0 0
  %722 = vmatpush1.bf16.msra.mxu0 %v643
  %723 = vmatprep.subr.bf16.mxu0 0
  %724 = vmatpush1.bf16.msra.mxu0 %v644
  %725 = vmatprep.subr.bf16.mxu0 0
  %726 = vmatpush1.bf16.msra.mxu0 %v645
  %727 = vmatprep.subr.bf16.mxu0 0
  %728 = vmatpush1.bf16.msra.mxu0 0
  %729 = vmatprep.subr.bf16.mxu0 0
  %730 = vmatpush1.bf16.msra.mxu0 0
  %731 = vmatprep.subr.bf16.mxu0 0
  %732 = vmatpush1.bf16.msra.mxu0 0
  %733 = vmatprep.subr.bf16.mxu0 0
  %734 = vmatpush1.bf16.msra.mxu0 0
  %735 = vmatprep.subr.bf16.mxu0 0
  %736 = vmatpush1.bf16.msra.mxu0 0
  %737 = vmatprep.subr.bf16.mxu0 0
  %738 = vmatpush1.bf16.msra.mxu0 0
  %739 = vmatprep.subr.bf16.mxu0 0
  %740 = vmatpush1.bf16.msra.mxu0 0
  %741 = vmatprep.subr.bf16.mxu0 0
  %742 = vmatpush1.bf16.msra.mxu0 0
  %743 = vmatprep.mubr.bf16.mxu0 0
  %744 = vmatmul.mubr.bf16.gmra.mrb[0].mxu0 %v477
  %v745 = vpop.f32.mrb[0].mxu0
  %v746 = vadd.f32 %v705, %v745
  %v747 = vpop.f32.mrb[0].mxu0
  %v748 = vpop.f32.mrb[0].mxu0
  %v749 = vadd.f32 %v708, %v748
  %v750 = vpop.f32.mrb[0].mxu0
  %751 = vdwg.mxu0
  %v752 = vadd.f32 %v746, %v749
  %v753 = vrot.slane %v752, 4
  %v754 = vadd.f32 %v752, %v753
  %v755 = vrot.slane %v754, 2
  %v756 = vadd.f32 %v754, %v755
  %v757 = vrot.slane %v756, 1
  %v758 = vadd.f32 %v756, %v757
  %v759 = vmul.f32 %v746, %v746
  %v760 = vmul.f32 %v749, %v749
  %v761 = vadd.f32 %v759, %v760
  %v762 = vrot.slane %v761, 4
  %v763 = vadd.f32 %v761, %v762
  %v764 = vrot.slane %v763, 2
  %v765 = vadd.f32 %v763, %v764
  %v766 = vrot.slane %v765, 1
  %v767 = vadd.f32 %v765, %v766
  %vm768 = vcmask 1040384
  %v769 = vsel %vm768, %v758, %v767
  %770 = vmatprep.subr.mxu0 0.0
  %771 = vmatpush1.msra.mxu0 %v282
  %772 = vmatprep.subr.mxu0 0.0
  %773 = vmatpush1.msra.mxu0 %v283
  %774 = vmatprep.subr.mxu0 0.0
  %775 = vmatpush1.msra.mxu0 %v284
  %776 = vmatprep.subr.mxu0 0.0
  %777 = vmatpush1.msra.mxu0 %v285
  %778 = vmatprep.subr.mxu0 0.0
  %779 = vmatpush1.msra.mxu0 %v286
  %780 = vmatprep.subr.mxu0 0.0
  %781 = vmatpush1.msra.mxu0 %v287
  %782 = vmatprep.subr.mxu0 0.0
  %783 = vmatpush1.msra.mxu0 %v288
  %784 = vmatprep.subr.mxu0 0.0
  %785 = vmatpush1.msra.mxu0 %v289
  %786 = vmatprep.subr.mxu0 0.0
  %787 = vmatpush1.msra.mxu0 %v290
  %788 = vmatprep.subr.mxu0 0.0
  %789 = vmatpush1.msra.mxu0 %v291
  %790 = vmatprep.subr.mxu0 0.0
  %791 = vmatpush1.msra.mxu0 %v292
  %792 = vmatprep.subr.mxu0 0.0
  %793 = vmatpush1.msra.mxu0 %v293
  %794 = vmatprep.subr.mxu0 0.0
  %795 = vmatpush1.msra.mxu0 %v294
  %796 = vmatprep.subr.mxu0 0.0
  %797 = vmatpush1.msra.mxu0 %v295
  %798 = vmatprep.subr.mxu0 0.0
  %799 = vmatpush1.msra.mxu0 %v296
  %800 = vmatprep.subr.mxu0 0.0
  %801 = vmatpush1.msra.mxu0 %v297
  %802 = vmatprep.subr.mxu0 0.0
  %803 = vmatpush1.msra.mxu0 0.0
  %804 = vmatprep.subr.mxu0 0.0
  %805 = vmatpush1.msra.mxu0 0.0
  %806 = vmatprep.subr.mxu0 0.0
  %807 = vmatpush1.msra.mxu0 0.0
  %808 = vmatprep.subr.mxu0 0.0
  %809 = vmatpush1.msra.mxu0 0.0
  %810 = vmatprep.subr.mxu0 0.0
  %811 = vmatpush1.msra.mxu0 0.0
  %812 = vmatprep.subr.mxu0 0.0
  %813 = vmatpush1.msra.mxu0 0.0
  %814 = vmatprep.subr.mxu0 0.0
  %815 = vmatpush1.msra.mxu0 0.0
  %816 = vmatprep.subr.mxu0 0.0
  %817 = vmatpush1.msra.mxu0 0.0
  %818 = vmatprep.subr.mxu0 0.0
  %819 = vmatpush1.msra.mxu0 0.0
  %820 = vmatprep.subr.mxu0 0.0
  %821 = vmatpush1.msra.mxu0 0.0
  %822 = vmatprep.subr.mxu0 0.0
  %823 = vmatpush1.msra.mxu0 0.0
  %824 = vmatprep.subr.mxu0 0.0
  %825 = vmatpush1.msra.mxu0 0.0
  %826 = vmatprep.subr.mxu0 0.0
  %827 = vmatpush1.msra.mxu0 0.0
  %828 = vmatprep.subr.mxu0 0.0
  %829 = vmatpush1.msra.mxu0 0.0
  %830 = vmatprep.subr.mxu0 0.0
  %831 = vmatpush1.msra.mxu0 0.0
  %832 = vmatprep.subr.mxu0 0.0
  %833 = vmatpush1.msra.mxu0 0.0
  %834 = vmatprep.mubr.f32.mxu0 0.0
  %835 = vmatmul.mubr.f32.gmra.mrb[0].mxu0 %v769
  %v836 = vpop.f32.mrb[0].mxu0
  %v837 = vadd.f32 0.0, %v836
  %v838 = vpop.f32.mrb[0].mxu0
  %839 = vdwg.mxu0
  %v840 = vmul.f32 %v837, 0.001953125
  %v841 = vmul.f32 %v840, %v840
  %v843 = vrot.slane %v841, 7
  %v845 = vsub.f32 %v840, %v843
  %v846 = vadd.f32 %v845, 1e-05
  %v847 = vrsqrt.pop %v846
  %v848 = vlaneseq
  %v849 = vshrl.u32 %v848, 7
  %v850 = vsub.s32 0, %v849
  %v851 = vrot.slane %v840, %v850
  %v852 = vsub.f32 %v746, %v851
  %v853 = vsub.f32 %v749, %v851
  %v854 = vlaneseq
  %v855 = vshrl.u32 %v854, 7
  %v856 = vsub.s32 1, %v855
  %v857 = vrot.slane %v847, %v856
  %v858 = vmul.f32 %v852, %v857
  %v859 = vmul.f32 %v853, %v857
  %v860 = vld [vmem:[%s3] sm:$0x1]
  %v862 = vlaneseq
  %v863 = vshrl.u32 %v862, 7
  %v864 = vsub.s32 0, %v863
  %v865 = vrot.slane %v860, %v864
  %v867 = vmul.f32 %v858, %v865
  %v868 = vmul.f32 %v859, %v865
  %v869 = vld [vmem:[%s4] sm:$0x1]
  %v871 = vlaneseq
  %v872 = vshrl.u32 %v871, 7
  %v873 = vsub.s32 0, %v872
  %v874 = vrot.slane %v869, %v873
  %v876 = vadd.f32 %v867, %v874
  %v877 = vadd.f32 %v868, %v874
  %v878 = vmax.f32 %v876, 0.0
  %v879 = vmax.f32 %v877, 0.0
  %v882 = vcombine.high %v878, %v878
  %v884 = vunpack.c.l.s4 1983009808
  %v885 = vunpack.c.0.s8 %v884
  %v886 = vlaneseq
  %v887 = vshrl.u32 %v886, 7
  %v888 = vsub.s32 %v885, %v887
  %v889 = vrot.slane %v878, %v888
  %v891 = vunpack.c.l.s4 1983009808
  %v892 = vunpack.c.0.s8 %v891
  %v893 = vlaneseq
  %v894 = vshrl.u32 %v893, 7
  %v895 = vsub.s32 %v892, %v894
  %v896 = vrot.slane %v882, %v895
  %v897 = vcombine.high %v889, %v889
  %v898 = vcombine.high %v896, %v896
  %v899 = vcombine.high %v879, %v879
  %v901 = vunpack.c.l.s4 1983009808
  %v902 = vunpack.c.0.s8 %v901
  %v903 = vlaneseq
  %v904 = vshrl.u32 %v903, 7
  %v905 = vsub.s32 %v902, %v904
  %v906 = vrot.slane %v879, %v905
  %v908 = vunpack.c.l.s4 1983009808
  %v909 = vunpack.c.0.s8 %v908
  %v910 = vlaneseq
  %v911 = vshrl.u32 %v910, 7
  %v912 = vsub.s32 %v909, %v911
  %v913 = vrot.slane %v899, %v912
  %v914 = vcombine.high %v906, %v906
  %v915 = vcombine.high %v913, %v913
  %924 = vst [vmem:[%s309] sm:$0x3] %v889
  %925 = vst [vmem:[%s309 + $0x2] sm:$0x3] %v897
  %926 = vst [vmem:[%s309 + $0x4] sm:$0x3] %v896
  %927 = vst [vmem:[%s309 + $0x6] sm:$0x3] %v898
  %928 = vst [vmem:[%s309 + $0x8] sm:$0x3] %v906
  %929 = vst [vmem:[%s309 + $0xa] sm:$0x3] %v914
  %930 = vst [vmem:[%s309 + $0xc] sm:$0x3] %v913
  %931 = vst [vmem:[%s309 + $0xe] sm:$0x3] %v915
  %v932 = vld [vmem:[#allocation2] sm:$0x3]
  %v933 = vld [vmem:[#allocation2 + $0x2] sm:$0x3]
  %v934 = vld [vmem:[#allocation2 + $0x4] sm:$0x3]
  %v935 = vld [vmem:[#allocation2 + $0x6] sm:$0x3]
  %v936 = vld [vmem:[#allocation2 + $0x8] sm:$0x3]
  %v937 = vld [vmem:[#allocation2 + $0xa] sm:$0x3]
  %v938 = vld [vmem:[#allocation2 + $0xc] sm:$0x3]
  %v939 = vld [vmem:[#allocation2 + $0xe] sm:$0x3]
  %v948 = vcombine.low %v932, %v933
  %v949 = vcombine.low %v934, %v935
  %v951 = vunpack.c.l.s4 1983009808
  %v952 = vunpack.c.0.s8 %v951
  %v953 = vlaneseq
  %v954 = vshrl.u32 %v953, 7
  %v955 = vsub.s32 %v952, %v954
  %v956 = vrot.slane %v948, %v955
  %v958 = vunpack.c.l.s4 1983009808
  %v959 = vunpack.c.0.s8 %v958
  %v960 = vlaneseq
  %v961 = vshrl.u32 %v960, 7
  %v962 = vsub.s32 %v959, %v961
  %v963 = vrot.slane %v949, %v962
  %v964 = vcombine.low %v956, %v963
  %v965 = vcombine.low %v936, %v937
  %v966 = vcombine.low %v938, %v939
  %v968 = vunpack.c.l.s4 1983009808
  %v969 = vunpack.c.0.s8 %v968
  %v970 = vlaneseq
  %v971 = vshrl.u32 %v970, 7
  %v972 = vsub.s32 %v969, %v971
  %v973 = vrot.slane %v965, %v972
  %v975 = vunpack.c.l.s4 1983009808
  %v976 = vunpack.c.0.s8 %v975
  %v977 = vlaneseq
  %v978 = vshrl.u32 %v977, 7
  %v979 = vsub.s32 %v976, %v978
  %v980 = vrot.slane %v966, %v979
  %v981 = vcombine.low %v973, %v980
  %v984 = vpack.c.bf16 %v981, %v964
  %v985 = vld [vmem:[%s309] sm:$0x3]
  %v986 = vld [vmem:[%s309 + $0x2] sm:$0x3]
  %v987 = vld [vmem:[%s309 + $0x4] sm:$0x3]
  %v988 = vld [vmem:[%s309 + $0x6] sm:$0x3]
  %v989 = vld [vmem:[%s309 + $0x8] sm:$0x3]
  %v990 = vld [vmem:[%s309 + $0xa] sm:$0x3]
  %v991 = vld [vmem:[%s309 + $0xc] sm:$0x3]
  %v992 = vld [vmem:[%s309 + $0xe] sm:$0x3]
  %v1001 = vcombine.low %v985, %v986
  %v1002 = vcombine.low %v987, %v988
  %v1004 = vunpack.c.l.s4 1983009808
  %v1005 = vunpack.c.0.s8 %v1004
  %v1006 = vlaneseq
  %v1007 = vshrl.u32 %v1006, 7
  %v1008 = vsub.s32 %v1005, %v1007
  %v1009 = vrot.slane %v1001, %v1008
  %v1011 = vunpack.c.l.s4 1983009808
  %v1012 = vunpack.c.0.s8 %v1011
  %v1013 = vlaneseq
  %v1014 = vshrl.u32 %v1013, 7
  %v1015 = vsub.s32 %v1012, %v1014
  %v1016 = vrot.slane %v1002, %v1015
  %v1017 = vcombine.low %v1009, %v1016
  %v1018 = vcombine.low %v989, %v990
  %v1019 = vcombine.low %v991, %v992
  %v1021 = vunpack.c.l.s4 1983009808
  %v1022 = vunpack.c.0.s8 %v1021
  %v1023 = vlaneseq
  %v1024 = vshrl.u32 %v1023, 7
  %v1025 = vsub.s32 %v1022, %v1024
  %v1026 = vrot.slane %v1018, %v1025
  %v1028 = vunpack.c.l.s4 1983009808
  %v1029 = vunpack.c.0.s8 %v1028
  %v1030 = vlaneseq
  %v1031 = vshrl.u32 %v1030, 7
  %v1032 = vsub.s32 %v1029, %v1031
  %v1033 = vrot.slane %v1019, %v1032
  %v1034 = vcombine.low %v1026, %v1033
  %v1037 = vpack.c.bf16 %v1034, %v1017
  %v1038 = vld [vmem:[%s424] sm:$0x3]
  %v1039 = vld [vmem:[%s424 + $0x2] sm:$0x3]
  %v1040 = vld [vmem:[%s424 + $0x4] sm:$0x3]
  %v1041 = vld [vmem:[%s424 + $0x6] sm:$0x3]
  %v1042 = vld [vmem:[%s424 + $0x8] sm:$0x3]
  %v1043 = vld [vmem:[%s424 + $0xa] sm:$0x3]
  %v1044 = vld [vmem:[%s424 + $0xc] sm:$0x3]
  %v1045 = vld [vmem:[%s424 + $0xe] sm:$0x3]
  %v1054 = vcombine.low %v1038, %v1039
  %v1055 = vcombine.low %v1040, %v1041
  %v1057 = vunpack.c.l.s4 1983009808
  %v1058 = vunpack.c.0.s8 %v1057
  %v1059 = vlaneseq
  %v1060 = vshrl.u32 %v1059, 7
  %v1061 = vsub.s32 %v1058, %v1060
  %v1062 = vrot.slane %v1054, %v1061
  %v1064 = vunpack.c.l.s4 1983009808
  %v1065 = vunpack.c.0.s8 %v1064
  %v1066 = vlaneseq
  %v1067 = vshrl.u32 %v1066, 7
  %v1068 = vsub.s32 %v1065, %v1067
  %v1069 = vrot.slane %v1055, %v1068
  %v1070 = vcombine.low %v1062, %v1069
  %v1071 = vcombine.low %v1042, %v1043
  %v1072 = vcombine.low %v1044, %v1045
  %v1074 = vunpack.c.l.s4 1983009808
  %v1075 = vunpack.c.0.s8 %v1074
  %v1076 = vlaneseq
  %v1077 = vshrl.u32 %v1076, 7
  %v1078 = vsub.s32 %v1075, %v1077
  %v1079 = vrot.slane %v1071, %v1078
  %v1081 = vunpack.c.l.s4 1983009808
  %v1082 = vunpack.c.0.s8 %v1081
  %v1083 = vlaneseq
  %v1084 = vshrl.u32 %v1083, 7
  %v1085 = vsub.s32 %v1082, %v1084
  %v1086 = vrot.slane %v1072, %v1085
  %v1087 = vcombine.low %v1079, %v1086
  %v1090 = vpack.c.bf16 %v1087, %v1070
  %v1091 = vld [vmem:[%s2] sm:$0xf]
  %v1092 = vld [vmem:[%s2 + $0x4] sm:$0xf]
  %v1093 = vld [vmem:[%s2 + $0x8] sm:$0xf]
  %v1094 = vld [vmem:[%s2 + $0xc] sm:$0xf]
  %v1095 = vld [vmem:[%s2 + $0x10] sm:$0xf]
  %v1096 = vld [vmem:[%s2 + $0x14] sm:$0xf]
  %v1097 = vld [vmem:[%s2 + $0x18] sm:$0xf]
  %v1098 = vld [vmem:[%s2 + $0x1c] sm:$0xf]
  %v1099 = vld [vmem:[%s2 + $0x20] sm:$0xf]
  %v1100 = vld [vmem:[%s2 + $0x24] sm:$0xf]
  %v1101 = vld [vmem:[%s2 + $0x28] sm:$0xf]
  %v1102 = vld [vmem:[%s2 + $0x2c] sm:$0xf]
  %v1103 = vld [vmem:[%s2 + $0x30] sm:$0xf]
  %v1104 = vld [vmem:[%s2 + $0x34] sm:$0xf]
  %v1105 = vld [vmem:[%s2 + $0x38] sm:$0xf]
  %v1106 = vld [vmem:[%s2 + $0x3c] sm:$0xf]
  %v1107 = vld [vmem:[%s2 + $0x40] sm:$0xf]
  %v1108 = vld [vmem:[%s2 + $0x44] sm:$0xf]
  %v1109 = vld [vmem:[%s2 + $0x48] sm:$0xf]
  %v1110 = vld [vmem:[%s2 + $0x4c] sm:$0xf]
  %v1111 = vld [vmem:[%s2 + $0x50] sm:$0xf]
  %v1112 = vld [vmem:[%s2 + $0x54] sm:$0xf]
  %v1113 = vld [vmem:[%s2 + $0x58] sm:$0xf]
  %v1114 = vld [vmem:[%s2 + $0x5c] sm:$0xf]
  %v1115 = vld [vmem:[%s2 + $0x60] sm:$0xf]
  %v1116 = vld [vmem:[%s2 + $0x64] sm:$0xf]
  %v1117 = vld [vmem:[%s2 + $0x68] sm:$0xf]
  %v1118 = vld [vmem:[%s2 + $0x6c] sm:$0xf]
  %v1119 = vld [vmem:[%s2 + $0x70] sm:$0xf]
  %v1120 = vld [vmem:[%s2 + $0x74] sm:$0xf]
  %v1121 = vld [vmem:[%s2 + $0x78] sm:$0xf]
  %v1122 = vld [vmem:[%s2 + $0x7c] sm:$0xf]
  %v1123 = vld [vmem:[%s2 + $0x80] sm:$0xf]
  %v1124 = vld [vmem:[%s2 + $0x84] sm:$0xf]
  %v1125 = vld [vmem:[%s2 + $0x88] sm:$0xf]
  %v1126 = vld [vmem:[%s2 + $0x8c] sm:$0xf]
  %v1127 = vld [vmem:[%s2 + $0x90] sm:$0xf]
  %v1128 = vld [vmem:[%s2 + $0x94] sm:$0xf]
  %v1129 = vld [vmem:[%s2 + $0x98] sm:$0xf]
  %v1130 = vld [vmem:[%s2 + $0x9c] sm:$0xf]
  %v1131 = vld [vmem:[%s2 + $0xa0] sm:$0xf]
  %v1132 = vld [vmem:[%s2 + $0xa4] sm:$0xf]
  %v1133 = vld [vmem:[%s2 + $0xa8] sm:$0xf]
  %v1134 = vld [vmem:[%s2 + $0xac] sm:$0xf]
  %v1135 = vld [vmem:[%s2 + $0xb0] sm:$0xf]
  %v1136 = vld [vmem:[%s2 + $0xb4] sm:$0xf]
  %v1137 = vld [vmem:[%s2 + $0xb8] sm:$0xf]
  %v1138 = vld [vmem:[%s2 + $0xbc] sm:$0xf]
  %v1187 = vunpack.c.l.b16 %v1091
  %v1188 = vunpack.c.l.b16 %v1092
  %v1189 = vunpack.c.l.b16 %v1093
  %v1190 = vunpack.c.l.b16 %v1094
  %v1191 = vunpack.c.l.b16 %v1095
  %v1192 = vunpack.c.l.b16 %v1096
  %v1193 = vunpack.c.l.b16 %v1097
  %v1194 = vunpack.c.l.b16 %v1098
  %v1195 = vunpack.c.l.b16 %v1099
  %v1196 = vunpack.c.l.b16 %v1100
  %v1197 = vunpack.c.l.b16 %v1101
  %v1198 = vunpack.c.l.b16 %v1102
  %v1199 = vunpack.c.l.b16 %v1103
  %v1200 = vunpack.c.l.b16 %v1104
  %v1201 = vunpack.c.l.b16 %v1105
  %v1202 = vunpack.c.l.b16 %v1106
  %v1203 = vunpack.c.l.b16 %v1107
  %v1204 = vunpack.c.l.b16 %v1108
  %v1205 = vunpack.c.l.b16 %v1109
  %v1206 = vunpack.c.l.b16 %v1110
  %v1207 = vunpack.c.l.b16 %v1111
  %v1208 = vunpack.c.l.b16 %v1112
  %v1209 = vunpack.c.l.b16 %v1113
  %v1210 = vunpack.c.l.b16 %v1114
  %v1211 = vunpack.c.l.b16 %v1115
  %v1212 = vunpack.c.l.b16 %v1116
  %v1213 = vunpack.c.l.b16 %v1117
  %v1214 = vunpack.c.l.b16 %v1118
  %v1215 = vunpack.c.l.b16 %v1119
  %v1216 = vunpack.c.l.b16 %v1120
  %v1217 = vunpack.c.l.b16 %v1121
  %v1218 = vunpack.c.l.b16 %v1122
  %v1219 = vunpack.c.l.b16 %v1123
  %v1220 = vunpack.c.l.b16 %v1124
  %v1221 = vunpack.c.l.b16 %v1125
  %v1222 = vunpack.c.l.b16 %v1126
  %v1223 = vunpack.c.l.b16 %v1127
  %v1224 = vunpack.c.l.b16 %v1128
  %v1225 = vunpack.c.l.b16 %v1129
  %v1226 = vunpack.c.l.b16 %v1130
  %v1227 = vunpack.c.l.b16 %v1131
  %v1228 = vunpack.c.l.b16 %v1132
  %v1229 = vunpack.c.l.b16 %v1133
  %v1230 = vunpack.c.l.b16 %v1134
  %v1231 = vunpack.c.l.b16 %v1135
  %v1232 = vunpack.c.l.b16 %v1136
  %v1233 = vunpack.c.l.b16 %v1137
  %v1234 = vunpack.c.l.b16 %v1138
  %v1235 = vpack.c.b16 %v1188, %v1187
  %v1236 = vpack.c.b16 %v1190, %v1189
  %v1237 = vpack.c.b16 %v1192, %v1191
  %v1238 = vpack.c.b16 %v1194, %v1193
  %v1239 = vpack.c.b16 %v1196, %v1195
  %v1240 = vpack.c.b16 %v1198, %v1197
  %v1241 = vpack.c.b16 %v1200, %v1199
  %v1242 = vpack.c.b16 %v1202, %v1201
  %v1243 = vpack.c.b16 %v1204, %v1203
  %v1244 = vpack.c.b16 %v1206, %v1205
  %v1245 = vpack.c.b16 %v1208, %v1207
  %v1246 = vpack.c.b16 %v1210, %v1209
  %v1247 = vpack.c.b16 %v1212, %v1211
  %v1248 = vpack.c.b16 %v1214, %v1213
  %v1249 = vpack.c.b16 %v1216, %v1215
  %v1250 = vpack.c.b16 %v1218, %v1217
  %v1251 = vpack.c.b16 %v1220, %v1219
  %v1252 = vpack.c.b16 %v1222, %v1221
  %v1253 = vpack.c.b16 %v1224, %v1223
  %v1254 = vpack.c.b16 %v1226, %v1225
  %v1255 = vpack.c.b16 %v1228, %v1227
  %v1256 = vpack.c.b16 %v1230, %v1229
  %v1257 = vpack.c.b16 %v1232, %v1231
  %v1258 = vpack.c.b16 %v1234, %v1233
  %1283 = vmatprep.subr.bf16.mxu0 0
  %1284 = vmatpush1.bf16.msra.mxu0 %v1235
  %1285 = vmatprep.subr.bf16.mxu0 0
  %1286 = vmatpush1.bf16.msra.mxu0 %v1236
  %1287 = vmatprep.subr.bf16.mxu0 0
  %1288 = vmatpush1.bf16.msra.mxu0 %v1237
  %1289 = vmatprep.subr.bf16.mxu0 0
  %1290 = vmatpush1.bf16.msra.mxu0 %v1238
  %1291 = vmatprep.subr.bf16.mxu0 0
  %1292 = vmatpush1.bf16.msra.mxu0 %v1239
  %1293 = vmatprep.subr.bf16.mxu0 0
  %1294 = vmatpush1.bf16.msra.mxu0 %v1240
  %1295 = vmatprep.subr.bf16.mxu0 0
  %1296 = vmatpush1.bf16.msra.mxu0 %v1241
  %1297 = vmatprep.subr.bf16.mxu0 0
  %1298 = vmatpush1.bf16.msra.mxu0 %v1242
  %1299 = vmatprep.subr.bf16.mxu0 0
  %1300 = vmatpush1.bf16.msra.mxu0 %v1243
  %1301 = vmatprep.subr.bf16.mxu0 0
  %1302 = vmatpush1.bf16.msra.mxu0 %v1244
  %1303 = vmatprep.subr.bf16.mxu0 0
  %1304 = vmatpush1.bf16.msra.mxu0 %v1245
  %1305 = vmatprep.subr.bf16.mxu0 0
  %1306 = vmatpush1.bf16.msra.mxu0 %v1246
  %1307 = vmatprep.subr.bf16.mxu0 0
  %1308 = vmatpush1.bf16.msra.mxu0 %v1247
  %1309 = vmatprep.subr.bf16.mxu0 0
  %1310 = vmatpush1.bf16.msra.mxu0 %v1248
  %1311 = vmatprep.subr.bf16.mxu0 0
  %1312 = vmatpush1.bf16.msra.mxu0 %v1249
  %1313 = vmatprep.subr.bf16.mxu0 0
  %1314 = vmatpush1.bf16.msra.mxu0 %v1250
  %1315 = vmatprep.mubr.bf16.mxu0 %v1037
  %1316 = vmatmul.mubr.bf16.gmra.mrb[0].mxu0 %v984
  %v1317 = vpop.f32.mrb[0].mxu0
  %v1318 = vadd.f32 0.0, %v1317
  %v1319 = vpop.f32.mrb[0].mxu0
  %v1320 = vpop.f32.mrb[0].mxu0
  %v1321 = vadd.f32 0.0, %v1320
  %v1322 = vpop.f32.mrb[0].mxu0
  %1323 = vdwg.mxu0
  %1324 = vmatprep.subr.bf16.mxu0 0
  %1325 = vmatpush1.bf16.msra.mxu0 %v1251
  %1326 = vmatprep.subr.bf16.mxu0 0
  %1327 = vmatpush1.bf16.msra.mxu0 %v1252
  %1328 = vmatprep.subr.bf16.mxu0 0
  %1329 = vmatpush1.bf16.msra.mxu0 %v1253
  %1330 = vmatprep.subr.bf16.mxu0 0
  %1331 = vmatpush1.bf16.msra.mxu0 %v1254
  %1332 = vmatprep.subr.bf16.mxu0 0
  %1333 = vmatpush1.bf16.msra.mxu0 %v1255
  %1334 = vmatprep.subr.bf16.mxu0 0
  %1335 = vmatpush1.bf16.msra.mxu0 %v1256
  %1336 = vmatprep.subr.bf16.mxu0 0
  %1337 = vmatpush1.bf16.msra.mxu0 %v1257
  %1338 = vmatprep.subr.bf16.mxu0 0
  %1339 = vmatpush1.bf16.msra.mxu0 %v1258
  %1340 = vmatprep.subr.bf16.mxu0 0
  %1341 = vmatpush1.bf16.msra.mxu0 0
  %1342 = vmatprep.subr.bf16.mxu0 0
  %1343 = vmatpush1.bf16.msra.mxu0 0
  %1344 = vmatprep.subr.bf16.mxu0 0
  %1345 = vmatpush1.bf16.msra.mxu0 0
  %1346 = vmatprep.subr.bf16.mxu0 0
  %1347 = vmatpush1.bf16.msra.mxu0 0
  %1348 = vmatprep.subr.bf16.mxu0 0
  %1349 = vmatpush1.bf16.msra.mxu0 0
  %1350 = vmatprep.subr.bf16.mxu0 0
  %1351 = vmatpush1.bf16.msra.mxu0 0
  %1352 = vmatprep.subr.bf16.mxu0 0
  %1353 = vmatpush1.bf16.msra.mxu0 0
  %1354 = vmatprep.subr.bf16.mxu0 0
  %1355 = vmatpush1.bf16.msra.mxu0 0
  %1356 = vmatprep.mubr.bf16.mxu0 0
  %1357 = vmatmul.mubr.bf16.gmra.mrb[0].mxu0 %v1090
  %v1358 = vpop.f32.mrb[0].mxu0
  %v1359 = vadd.f32 %v1318, %v1358
  %v1360 = vpop.f32.mrb[0].mxu0
  %v1361 = vpop.f32.mrb[0].mxu0
  %v1362 = vadd.f32 %v1321, %v1361
  %v1363 = vpop.f32.mrb[0].mxu0
  %1364 = vdwg.mxu0
  %v1365 = vadd.f32 %v1359, %v1362
  %v1366 = vrot.slane %v1365, 4
  %v1367 = vadd.f32 %v1365, %v1366
  %v1368 = vrot.slane %v1367, 2
  %v1369 = vadd.f32 %v1367, %v1368
  %v1370 = vrot.slane %v1369, 1
  %v1371 = vadd.f32 %v1369, %v1370
  %v1372 = vmul.f32 %v1359, %v1359
  %v1373 = vmul.f32 %v1362, %v1362
  %v1374 = vadd.f32 %v1372, %v1373
  %v1375 = vrot.slane %v1374, 4
  %v1376 = vadd.f32 %v1374, %v1375
  %v1377 = vrot.slane %v1376, 2
  %v1378 = vadd.f32 %v1376, %v1377
  %v1379 = vrot.slane %v1378, 1
  %v1380 = vadd.f32 %v1378, %v1379
  %v1381 = vsel %vm768, %v1371, %v1380
  %1382 = vmatprep.subr.mxu0 0.0
  %1383 = vmatpush1.msra.mxu0 %v282
  %1384 = vmatprep.subr.mxu0 0.0
  %1385 = vmatpush1.msra.mxu0 %v283
  %1386 = vmatprep.subr.mxu0 0.0
  %1387 = vmatpush1.msra.mxu0 %v284
  %1388 = vmatprep.subr.mxu0 0.0
  %1389 = vmatpush1.msra.mxu0 %v285
  %1390 = vmatprep.subr.mxu0 0.0
  %1391 = vmatpush1.msra.mxu0 %v286
  %1392 = vmatprep.subr.mxu0 0.0
  %1393 = vmatpush1.msra.mxu0 %v287
  %1394 = vmatprep.subr.mxu0 0.0
  %1395 = vmatpush1.msra.mxu0 %v288
  %1396 = vmatprep.subr.mxu0 0.0
  %1397 = vmatpush1.msra.mxu0 %v289
  %1398 = vmatprep.subr.mxu0 0.0
  %1399 = vmatpush1.msra.mxu0 %v290
  %1400 = vmatprep.subr.mxu0 0.0
  %1401 = vmatpush1.msra.mxu0 %v291
  %1402 = vmatprep.subr.mxu0 0.0
  %1403 = vmatpush1.msra.mxu0 %v292
  %1404 = vmatprep.subr.mxu0 0.0
  %1405 = vmatpush1.msra.mxu0 %v293
  %1406 = vmatprep.subr.mxu0 0.0
  %1407 = vmatpush1.msra.mxu0 %v294
  %1408 = vmatprep.subr.mxu0 0.0
  %1409 = vmatpush1.msra.mxu0 %v295
  %1410 = vmatprep.subr.mxu0 0.0
  %1411 = vmatpush1.msra.mxu0 %v296
  %1412 = vmatprep.subr.mxu0 0.0
  %1413 = vmatpush1.msra.mxu0 %v297
  %1414 = vmatprep.subr.mxu0 0.0
  %1415 = vmatpush1.msra.mxu0 0.0
  %1416 = vmatprep.subr.mxu0 0.0
  %1417 = vmatpush1.msra.mxu0 0.0
  %1418 = vmatprep.subr.mxu0 0.0
  %1419 = vmatpush1.msra.mxu0 0.0
  %1420 = vmatprep.subr.mxu0 0.0
  %1421 = vmatpush1.msra.mxu0 0.0
  %1422 = vmatprep.subr.mxu0 0.0
  %1423 = vmatpush1.msra.mxu0 0.0
  %1424 = vmatprep.subr.mxu0 0.0
  %1425 = vmatpush1.msra.mxu0 0.0
  %1426 = vmatprep.subr.mxu0 0.0
  %1427 = vmatpush1.msra.mxu0 0.0
  %1428 = vmatprep.subr.mxu0 0.0
  %1429 = vmatpush1.msra.mxu0 0.0
  %1430 = vmatprep.subr.mxu0 0.0
  %1431 = vmatpush1.msra.mxu0 0.0
  %1432 = vmatprep.subr.mxu0 0.0
  %1433 = vmatpush1.msra.mxu0 0.0
  %1434 = vmatprep.subr.mxu0 0.0
  %1435 = vmatpush1.msra.mxu0 0.0
  %1436 = vmatprep.subr.mxu0 0.0
  %1437 = vmatpush1.msra.mxu0 0.0
  %1438 = vmatprep.subr.mxu0 0.0
  %1439 = vmatpush1.msra.mxu0 0.0
  %1440 = vmatprep.subr.mxu0 0.0
  %1441 = vmatpush1.msra.mxu0 0.0
  %1442 = vmatprep.subr.mxu0 0.0
  %1443 = vmatpush1.msra.mxu0 0.0
  %1444 = vmatprep.subr.mxu0 0.0
  %1445 = vmatpush1.msra.mxu0 0.0
  %1446 = vmatprep.mubr.f32.mxu0 0.0
  %1447 = vmatmul.mubr.f32.gmra.mrb[0].mxu0 %v1381
  %v1448 = vpop.f32.mrb[0].mxu0
  %v1449 = vadd.f32 0.0, %v1448
  %v1450 = vpop.f32.mrb[0].mxu0
  %1451 = vdwg.mxu0
  %v1452 = vmul.f32 %v1449, 0.001953125
  %v1453 = vmul.f32 %v1452, %v1452
  %v1455 = vrot.slane %v1453, 7
  %v1457 = vsub.f32 %v1452, %v1455
  %v1458 = vadd.f32 %v1457, 1e-05
  %v1459 = vrsqrt.pop %v1458
  %v1460 = vlaneseq
  %v1461 = vshrl.u32 %v1460, 7
  %v1462 = vsub.s32 0, %v1461
  %v1463 = vrot.slane %v1452, %v1462
  %v1464 = vsub.f32 %v1359, %v1463
  %v1465 = vsub.f32 %v1362, %v1463
  %v1466 = vlaneseq
  %v1467 = vshrl.u32 %v1466, 7
  %v1468 = vsub.s32 1, %v1467
  %v1469 = vrot.slane %v1459, %v1468
  %v1470 = vmul.f32 %v1464, %v1469
  %v1471 = vmul.f32 %v1465, %v1469
  %v1472 = vld [vmem:[%s5] sm:$0x1]
  %v1474 = vlaneseq
  %v1475 = vshrl.u32 %v1474, 7
  %v1476 = vsub.s32 0, %v1475
  %v1477 = vrot.slane %v1472, %v1476
  %v1479 = vmul.f32 %v1470, %v1477
  %v1480 = vmul.f32 %v1471, %v1477
  %v1481 = vld [vmem:[%s6] sm:$0x1]
  %v1483 = vlaneseq
  %v1484 = vshrl.u32 %v1483, 7
  %v1485 = vsub.s32 0, %v1484
  %v1486 = vrot.slane %v1481, %v1485
  %v1488 = vadd.f32 %v1479, %v1486
  %v1489 = vadd.f32 %v1480, %v1486
  %v1492 = vcombine.high %v1488, %v1488
  %v1494 = vunpack.c.l.s4 1983009808
  %v1495 = vunpack.c.0.s8 %v1494
  %v1496 = vlaneseq
  %v1497 = vshrl.u32 %v1496, 7
  %v1498 = vsub.s32 %v1495, %v1497
  %v1499 = vrot.slane %v1488, %v1498
  %v1501 = vunpack.c.l.s4 1983009808
  %v1502 = vunpack.c.0.s8 %v1501
  %v1503 = vlaneseq
  %v1504 = vshrl.u32 %v1503, 7
  %v1505 = vsub.s32 %v1502, %v1504
  %v1506 = vrot.slane %v1492, %v1505
  %v1507 = vcombine.high %v1499, %v1499
  %v1508 = vcombine.high %v1506, %v1506
  %v1509 = vcombine.high %v1489, %v1489
  %v1511 = vunpack.c.l.s4 1983009808
  %v1512 = vunpack.c.0.s8 %v1511
  %v1513 = vlaneseq
  %v1514 = vshrl.u32 %v1513, 7
  %v1515 = vsub.s32 %v1512, %v1514
  %v1516 = vrot.slane %v1489, %v1515
  %v1518 = vunpack.c.l.s4 1983009808
  %v1519 = vunpack.c.0.s8 %v1518
  %v1520 = vlaneseq
  %v1521 = vshrl.u32 %v1520, 7
  %v1522 = vsub.s32 %v1519, %v1521
  %v1523 = vrot.slane %v1509, %v1522
  %v1524 = vcombine.high %v1516, %v1516
  %v1525 = vcombine.high %v1523, %v1523
  %v1534 = vadd.f32 %v1499, %v301
  %v1535 = vadd.f32 %v1507, %v302
  %v1536 = vadd.f32 %v1506, %v303
  %v1537 = vadd.f32 %v1508, %v304
  %v1538 = vadd.f32 %v1516, %v305
  %v1539 = vadd.f32 %v1524, %v306
  %v1540 = vadd.f32 %v1523, %v307
  %v1541 = vadd.f32 %v1525, %v308
  %v1542 = vmax.f32 %v1534, 0.0
  %v1543 = vmax.f32 %v1535, 0.0
  %v1544 = vmax.f32 %v1536, 0.0
  %v1545 = vmax.f32 %v1537, 0.0
  %v1546 = vmax.f32 %v1538, 0.0
  %v1547 = vmax.f32 %v1539, 0.0
  %v1548 = vmax.f32 %v1540, 0.0
  %v1549 = vmax.f32 %v1541, 0.0
  %1550 = vst [vmem:[%s7] sm:$0x3] %v1542
  %1551 = vst [vmem:[%s7 + $0x2] sm:$0x3] %v1543
  %1552 = vst [vmem:[%s7 + $0x4] sm:$0x3] %v1544
  %1553 = vst [vmem:[%s7 + $0x6] sm:$0x3] %v1545
  %1554 = vst [vmem:[%s7 + $0x8] sm:$0x3] %v1546
  %1555 = vst [vmem:[%s7 + $0xa] sm:$0x3] %v1547
  %1556 = vst [vmem:[%s7 + $0xc] sm:$0x3] %v1548
  %1557 = vst [vmem:[%s7 + $0xe] sm:$0x3] %v1549
  // Predicated region
  $region30: #{resblock_pallas.1} parent=0 // pred_check
    _
  $region31: #{resblock_pallas.1} parent=0 // pred_check_branch
    %1559 = sbr.rel (0) target = $region33
  $region32: #{resblock_pallas.1} parent=0 // pred_region
    _
  $region33: #{resblock_pallas.1} parent=0 // pred_fallthru
    _
  // Predicated region
  $region34: #{resblock_pallas.1} parent=0 // pred_check
    _
  $region35: #{resblock_pallas.1} parent=0 // pred_check_branch
    %1561 = sbr.rel (0) target = $region37
  $region36: #{resblock_pallas.1} parent=0 // pred_region
    _
  $region37: #{resblock_pallas.1} parent=0 // pred_fallthru
    _

</llo_original>
